<compile_context>
chip_gen: v7x
topology: tpu7x:2x2x1
jax: 0.10.0
libtpu: 0.0.40
codegen_flags: <defaults>
</compile_context>

<pallas_src>
import math
import jax
import jax.numpy as jnp
from jax.experimental import pallas as pl
from jax.experimental.pallas import tpu as pltpu

# ---------------- synthetic "small BERT" config ----------------
VOCAB = 100
TYPE_VOCAB = 2
MAX_POS = 16
HIDDEN = 32
N_HEADS = 2
HEAD_DIM = HIDDEN // N_HEADS
INTER = 64
N_LAYERS = 2
OUT1 = 3            # output_size1
OUT2 = 5            # output_size2
OUT_PAD = 128       # lane-dense padded head width (real outputs live in disjoint lanes)
LN_EPS = 1e-12
Q_SCALE = 1.0 / math.sqrt(HEAD_DIM)   # folded into packed Wq / bq at pack time

BATCH = 2
SEQ = 8

# Row layout of the consolidated small-vector tensor (per tower): (N_VEC_ROWS, 128)
ROW_BQKV, ROW_BO, ROW_G1, ROW_BE1, ROW_B1, ROW_B2, ROW_G2, ROW_BE2 = range(8)
ROWS_PER_LAYER = 8
ROW_EMB_G = N_LAYERS * ROWS_PER_LAYER
ROW_EMB_B = ROW_EMB_G + 1
ROW_HB = ROW_EMB_G + 2
N_VEC_ROWS = ROW_HB + 1


# ---------------- in-kernel helpers ----------------
def _layernorm(x, g, b):
    mu = jnp.mean(x, axis=-1, keepdims=True)
    var = jnp.mean((x - mu) ** 2, axis=-1, keepdims=True)
    return (x - mu) * jax.lax.rsqrt(var + LN_EPS) * g + b


def _gelu(x):
    # TODO(synk): tanh-approx GELU; PyTorch nn.GELU default is the exact erf form.
    c = math.sqrt(2.0 / math.pi)
    return 0.5 * x * (1.0 + jnp.tanh(c * (x + 0.044715 * x * x * x)))


# ---------------- the single fused Pallas kernel ----------------
# One grid step == one BERT tower: embedding LayerNorm + all encoder layers +
# mean-pool + (padded, lane-placed) linear head.
def fused_bert_kernel(x_ref, mask_ref,
                      wqkv_ref, wo_ref, w1_ref, w2_ref, hw_ref, vecs_ref,
                      out_ref, ctx_ref):
    B, S, H = x_ref.shape
    BS = B * S
    vecs = vecs_ref[...]                                  # (N_VEC_ROWS, 128) f32

    def vrow(r, w):                                       # (1, w) vector slice
        return vecs[r:r + 1, :w]

    # --- embedding LayerNorm (fused from the wrapper) ---
    x = _layernorm(x_ref[...].reshape(BS, H), vrow(ROW_EMB_G, H), vrow(ROW_EMB_B, H))

    # --- additive BERT attention-mask bias, hoisted once (JAX doesn't CSE broadcasts) ---
    bias_b = ((mask_ref[...].astype(jnp.float32) - 1.0) * 1e4)[:, None, :]   # (B,1,S)

    for l in range(N_LAYERS):                             # static unroll; weights in VMEM
        r = l * ROWS_PER_LAYER

        # --- fused QKV projection on the whole (B*S, H) slab (weights already bf16) ---
        qkv = jnp.dot(x.astype(jnp.bfloat16), wqkv_ref[l],
                      preferred_element_type=jnp.float32) + vrow(r + ROW_BQKV, 3 * H)
        qkv3 = qkv.astype(jnp.bfloat16).reshape(B, S, 3 * H)

        # --- attention: batched over B, static loop over heads; per-head context
        #     stored to VMEM scratch at static lane offsets (no lane concatenate) ---
        for h in range(N_HEADS):
            qh = qkv3[:, :, h * HEAD_DIM:(h + 1) * HEAD_DIM]                   # (B,S,D)
            kh = qkv3[:, :, H + h * HEAD_DIM:H + (h + 1) * HEAD_DIM]
            vh = qkv3[:, :, 2 * H + h * HEAD_DIM:2 * H + (h + 1) * HEAD_DIM]
            s = jnp.einsum('bqd,bkd->bqk', qh, kh,
                           preferred_element_type=jnp.float32)                 # scale pre-folded
            s = s + bias_b
            s = s - jnp.max(s, axis=-1, keepdims=True)
            p = jnp.exp(s)
            p = p * pl.reciprocal(jnp.sum(p, axis=-1, keepdims=True), approx=True)
            ctx_h = jnp.einsum('bqk,bkd->bqd', p.astype(jnp.bfloat16), vh,
                               preferred_element_type=jnp.float32)              # (B,S,D)
            ctx_ref[:, h * HEAD_DIM:(h + 1) * HEAD_DIM] = ctx_h.reshape(BS, HEAD_DIM)

        # --- output projection + residual + LayerNorm ---
        attn = jnp.dot(ctx_ref[...].astype(jnp.bfloat16), wo_ref[l],
                       preferred_element_type=jnp.float32) + vrow(r + ROW_BO, H)
        x1 = _layernorm(x + attn, vrow(r + ROW_G1, H), vrow(r + ROW_BE1, H))

        # --- FFN + residual + LayerNorm (elementwise math stays f32) ---
        ff = _gelu(jnp.dot(x1.astype(jnp.bfloat16), w1_ref[l],
                           preferred_element_type=jnp.float32) + vrow(r + ROW_B1, INTER))
        ff = jnp.dot(ff.astype(jnp.bfloat16), w2_ref[l],
                     preferred_element_type=jnp.float32) + vrow(r + ROW_B2, H)
        x = _layernorm(x1 + ff, vrow(r + ROW_G2, H), vrow(r + ROW_BE2, H))

    # --- mean-pool over seq (unmasked, matches torch.mean(x, dim=1)) + lane-placed head ---
    pooled = jnp.mean(x.reshape(B, S, H), axis=1)                               # (B, H)
    out_ref[...] = jnp.dot(pooled.astype(jnp.bfloat16), hw_ref[...],
                           preferred_element_type=jnp.float32) + vrow(ROW_HB, OUT_PAD)


def fused_bert_towers(x_raw, masks, P):
    """x_raw: (2,B,S,H) summed embeddings (pre-LN); masks: (2,B,S) int; P: packed params."""
    T, B, S, H = x_raw.shape

    def tower_spec(arr):
        nd = arr.ndim
        return pl.BlockSpec((None,) + tuple(arr.shape[1:]),
                            lambda t, _nd=nd: (t,) + (0,) * (_nd - 1))

    inputs = (x_raw, masks, P["wqkv"], P["wo"], P["w1"], P["w2"], P["hw"], P["vecs"])

    return pl.pallas_call(
        fused_bert_kernel,
        out_shape=jax.ShapeDtypeStruct((T, B, OUT_PAD), jnp.float32),
        grid=(T,),
        in_specs=[tower_spec(a) for a in inputs],
        out_specs=pl.BlockSpec((None, B, OUT_PAD), lambda t: (t, 0, 0)),
        scratch_shapes=[pltpu.VMEM((B * S, H), jnp.float32)],     # per-head ctx scratch
        compiler_params=pltpu.CompilerParams(
            dimension_semantics=("parallel",)),   # 2 towers -> 2 TCs on v7x; 2-step loop on v5e/v6e
    )(*inputs)


# ---------------- parameter init (deterministic, synthetic) ----------------
def _init(key, shape, scale=0.02):
    return scale * jax.random.normal(key, shape, dtype=jnp.float32)


def init_bert_params(key):
    keys = jax.random.split(key, 4 + N_LAYERS)
    params = {
        "word_emb": _init(keys[0], (VOCAB, HIDDEN)),
        "pos_emb": _init(keys[1], (MAX_POS, HIDDEN)),
        "type_emb": _init(keys[2], (TYPE_VOCAB, HIDDEN)),
        "emb_ln_g": jnp.ones((HIDDEN,), jnp.float32),
        "emb_ln_b": jnp.zeros((HIDDEN,), jnp.float32),
        "layers": [],
    }
    for l in range(N_LAYERS):
        ks = jax.random.split(keys[4 + l], 8)
        layer = (
            _init(ks[0], (HIDDEN, HIDDEN)), jnp.zeros((1, HIDDEN), jnp.float32),   # wq, bq
            _init(ks[1], (HIDDEN, HIDDEN)), jnp.zeros((1, HIDDEN), jnp.float32),   # wk, bk
            _init(ks[2], (HIDDEN, HIDDEN)), jnp.zeros((1, HIDDEN), jnp.float32),   # wv, bv
            _init(ks[3], (HIDDEN, HIDDEN)), jnp.zeros((1, HIDDEN), jnp.float32),   # wo, bo
            jnp.ones((1, HIDDEN), jnp.float32), jnp.zeros((1, HIDDEN), jnp.float32),  # ln1
            _init(ks[4], (HIDDEN, INTER)), jnp.zeros((1, INTER), jnp.float32),     # w1, b1
            _init(ks[5], (INTER, HIDDEN)), jnp.zeros((1, HIDDEN), jnp.float32),    # w2, b2
            jnp.ones((1, HIDDEN), jnp.float32), jnp.zeros((1, HIDDEN), jnp.float32),  # ln2
        )
        params["layers"].append(layer)
    return params


def init_regressor_params(key):
    k1, k2, k3, k4 = jax.random.split(key, 4)
    return {
        "bert1": init_bert_params(k1),
        "bert2": init_bert_params(k2),
        "lin1_w": _init(k3, (HIDDEN, OUT1)), "lin1_b": jnp.zeros((1, OUT1), jnp.float32),
        "lin2_w": _init(k4, (HIDDEN, OUT2)), "lin2_b": jnp.zeros((1, OUT2), jnp.float32),
    }


# ---------------- ONE-TIME packing (outside the per-call forward) ----------------
def _pad_lanes(v, width=OUT_PAD):
    return jnp.pad(v, ((0, 0), (0, width - v.shape[-1])))


def pack_params(params):
    """Stack towers/layers, fuse QKV + fold softmax scale, pre-cast matmul weights to
    bf16, consolidate all small vectors into one (N_VEC_ROWS,128) tensor per tower."""
    def per_tower(bp, head_w, head_b, lane_off, out_dim):
        wqkv_l, wo_l, w1_l, w2_l, vec_rows = [], [], [], [], []
        for l in range(N_LAYERS):
            (wq, bq, wk, bk, wv, bv, wo, bo, g1, be1,
             w1, b1, w2, b2, g2, be2) = bp["layers"][l]
            wqkv_l.append(jnp.concatenate([wq * Q_SCALE, wk, wv], axis=1))      # (H, 3H)
            wo_l.append(wo); w1_l.append(w1); w2_l.append(w2)
            vec_rows += [
                _pad_lanes(jnp.concatenate([bq * Q_SCALE, bk, bv], axis=1)),    # ROW_BQKV
                _pad_lanes(bo), _pad_lanes(g1), _pad_lanes(be1),
                _pad_lanes(b1), _pad_lanes(b2), _pad_lanes(g2), _pad_lanes(be2),
            ]
        vec_rows += [_pad_lanes(bp["emb_ln_g"][None, :]),
                     _pad_lanes(bp["emb_ln_b"][None, :])]
        hb = jnp.zeros((1, OUT_PAD), jnp.float32).at[:, lane_off:lane_off + out_dim].set(head_b)
        vec_rows.append(hb)                                                     # ROW_HB
        hw = jnp.zeros((HIDDEN, OUT_PAD), jnp.float32).at[:, lane_off:lane_off + out_dim].set(head_w)
        return (jnp.stack(wqkv_l), jnp.stack(wo_l), jnp.stack(w1_l), jnp.stack(w2_l),
                hw, jnp.concatenate(vec_rows, axis=0))

    t1 = per_tower(params["bert1"], params["lin1_w"], params["lin1_b"], 0, OUT1)
    t2 = per_tower(params["bert2"], params["lin2_w"], params["lin2_b"], OUT1, OUT2)

    def both(i, dtype):
        return jnp.stack([t1[i], t2[i]], axis=0).astype(dtype)

    return {
        "wqkv": both(0, jnp.bfloat16),   # (2, L, H, 3H)
        "wo":   both(1, jnp.bfloat16),   # (2, L, H, H)
        "w1":   both(2, jnp.bfloat16),   # (2, L, H, INTER)
        "w2":   both(3, jnp.bfloat16),   # (2, L, INTER, H)
        "hw":   both(4, jnp.bfloat16),   # (2, H, 128), real cols in disjoint lanes
        "vecs": both(5, jnp.float32),    # (2, N_VEC_ROWS, 128)
        "word_emb": jnp.stack([params["bert1"]["word_emb"], params["bert2"]["word_emb"]]),
        "pos_emb":  jnp.stack([params["bert1"]["pos_emb"],  params["bert2"]["pos_emb"]]),
        "type_emb": jnp.stack([params["bert1"]["type_emb"], params["bert2"]["type_emb"]]),
    }


# ---------------- forward pass (minimal JAX glue + one fused Pallas call) ----------------
def bert_regressor_forward(packed, ids1, m1, seg1, ids2, m2, seg2):
    # TODO(synk): dropout layers are eval-mode identities (no RNG-based drop here).
    ids = jnp.stack([ids1, ids2], axis=0)                        # (2,B,S)
    segs = jnp.stack([seg1, seg2], axis=0)
    masks = jnp.stack([m1, m2], axis=0).astype(jnp.int32)
    S = ids.shape[-1]

    gather = jax.vmap(lambda tbl, idx: tbl[idx])
    x_raw = (gather(packed["word_emb"], ids)
             + packed["pos_emb"][:, :S][:, None, :, :]
             + gather(packed["type_emb"], segs))                 # (2,B,S,H), pre-LN

    out = fused_bert_towers(x_raw, masks, packed)                # (2,B,128)
    # Tower 0 wrote lanes [0:OUT1], tower 1 lanes [OUT1:OUT1+OUT2]; rest are zero.
    return (out[0] + out[1])[:, :OUT1 + OUT2]                    # (B, OUT1+OUT2)


if __name__ == "__main__":
    key = jax.random.PRNGKey(0)
    pkey, dkey = jax.random.split(key)
    params = init_regressor_params(pkey)
    packed = jax.block_until_ready(pack_params(params))          # one-time packing

    k1, k2, k3, k4 = jax.random.split(dkey, 4)
    ids1 = jax.random.randint(k1, (BATCH, SEQ), 0, VOCAB, dtype=jnp.int32)
    ids2 = jax.random.randint(k2, (BATCH, SEQ), 0, VOCAB, dtype=jnp.int32)
    mask1 = jnp.ones((BATCH, SEQ), jnp.int32).at[:, SEQ - 2:].set(0)   # some padding
    mask2 = jnp.ones((BATCH, SEQ), jnp.int32).at[:, SEQ - 1:].set(0)
    seg1 = jnp.zeros((BATCH, SEQ), jnp.int32)
    seg2 = jnp.concatenate([jnp.zeros((BATCH, SEQ // 2), jnp.int32),
                            jnp.ones((BATCH, SEQ // 2), jnp.int32)], axis=1)

    fwd = jax.jit(bert_regressor_forward)
    out = fwd(packed, ids1, mask1, seg1, ids2, mask2, seg2)
    out = jax.block_until_ready(out)
    assert out.shape == (BATCH, OUT1 + OUT2) and out.dtype == jnp.float32
    assert bool(jnp.all(jnp.isfinite(out)))
    print("KERNEL_OK")
</pallas_src>

<mosaic_0001>
module attributes {stable_mosaic.version = 11 : i64} {
  func.func @fused_bert_kernel(%arg0: i32, %arg1: memref<1x2x8x32xf32, #tpu.memory_space<vmem>>, %arg2: memref<1x2x8xi32, #tpu.memory_space<vmem>>, %arg3: memref<1x2x32x96xbf16, #tpu.memory_space<vmem>>, %arg4: memref<1x2x32x32xbf16, #tpu.memory_space<vmem>>, %arg5: memref<1x2x32x64xbf16, #tpu.memory_space<vmem>>, %arg6: memref<1x2x64x32xbf16, #tpu.memory_space<vmem>>, %arg7: memref<1x32x128xbf16, #tpu.memory_space<vmem>>, %arg8: memref<1x19x128xf32, #tpu.memory_space<vmem>>, %arg9: memref<1x2x128xf32, #tpu.memory_space<vmem>>, %arg10: memref<16x32xf32, #tpu.memory_space<vmem>>) attributes {dimension_semantics = [#tpu.dimension_semantics<parallel>], iteration_bounds = array<i64: 2>, scalar_prefetch = 0 : i64, scratch_operands = 1 : i64, tpu.core_type = #tpu.core_type<tc>, window_params = [{transform_indices = @transform_0, window_bounds = array<i64: 1, 2, 8, 32>}, {transform_indices = @transform_1, window_bounds = array<i64: 1, 2, 8>}, {transform_indices = @transform_2, window_bounds = array<i64: 1, 2, 32, 96>}, {transform_indices = @transform_3, window_bounds = array<i64: 1, 2, 32, 32>}, {transform_indices = @transform_4, window_bounds = array<i64: 1, 2, 32, 64>}, {transform_indices = @transform_5, window_bounds = array<i64: 1, 2, 64, 32>}, {transform_indices = @transform_6, window_bounds = array<i64: 1, 32, 128>}, {transform_indices = @transform_7, window_bounds = array<i64: 1, 19, 128>}, {transform_indices = @transform_8, window_bounds = array<i64: 1, 2, 128>}]} {
    %c0 = arith.constant 0 : index
    %c0_0 = arith.constant 0 : index
    %c0_1 = arith.constant 0 : index
    %0 = vector.load %arg8[%c0, %c0_0, %c0_1] : memref<1x19x128xf32, #tpu.memory_space<vmem>>, vector<1x19x128xf32>
    %1 = vector.shape_cast %0 : vector<1x19x128xf32> to vector<19x128xf32>
    %c0_2 = arith.constant 0 : index
    %c0_3 = arith.constant 0 : index
    %c0_4 = arith.constant 0 : index
    %c0_5 = arith.constant 0 : index
    %2 = vector.load %arg1[%c0_2, %c0_3, %c0_4, %c0_5] : memref<1x2x8x32xf32, #tpu.memory_space<vmem>>, vector<1x2x8x32xf32>
    %3 = vector.shape_cast %2 : vector<1x2x8x32xf32> to vector<2x8x32xf32>
    %4 = vector.shape_cast %3 : vector<2x8x32xf32> to vector<16x32xf32>
    %5 = vector.extract_strided_slice %1 {offsets = [16, 0], sizes = [1, 32], strides = [1, 1]} : vector<19x128xf32> to vector<1x32xf32>
    %6 = vector.extract_strided_slice %1 {offsets = [17, 0], sizes = [1, 32], strides = [1, 1]} : vector<19x128xf32> to vector<1x32xf32>
    %cst = arith.constant dense<0.000000e+00> : vector<16xf32>
    %7 = vector.multi_reduction <add>, %4, %cst [1] : vector<16x32xf32> to vector<16xf32>
    %8 = vector.shape_cast %7 : vector<16xf32> to vector<16x1xf32>
    %cst_6 = arith.constant 3.200000e+01 : f32
    %9 = vector.broadcast %cst_6 : f32 to vector<16x1xf32>
    %10 = arith.divf %8, %9 : vector<16x1xf32>
    %11 = vector.broadcast %10 : vector<16x1xf32> to vector<16x32xf32>
    %12 = arith.subf %4, %11 : vector<16x32xf32>
    %13 = arith.mulf %12, %12 : vector<16x32xf32>
    %cst_7 = arith.constant dense<0.000000e+00> : vector<16xf32>
    %14 = vector.multi_reduction <add>, %13, %cst_7 [1] : vector<16x32xf32> to vector<16xf32>
    %15 = vector.shape_cast %14 : vector<16xf32> to vector<16x1xf32>
    %cst_8 = arith.constant 3.200000e+01 : f32
    %16 = vector.broadcast %cst_8 : f32 to vector<16x1xf32>
    %17 = arith.divf %15, %16 : vector<16x1xf32>
    %18 = vector.broadcast %10 : vector<16x1xf32> to vector<16x32xf32>
    %19 = arith.subf %4, %18 : vector<16x32xf32>
    %cst_9 = arith.constant 9.99999996E-13 : f32
    %20 = vector.broadcast %cst_9 : f32 to vector<16x1xf32>
    %21 = arith.addf %17, %20 : vector<16x1xf32>
    %22 = math.rsqrt %21 : vector<16x1xf32>
    %23 = vector.broadcast %22 : vector<16x1xf32> to vector<16x32xf32>
    %24 = arith.mulf %19, %23 : vector<16x32xf32>
    %25 = vector.broadcast %5 : vector<1x32xf32> to vector<16x32xf32>
    %26 = arith.mulf %24, %25 : vector<16x32xf32>
    %27 = vector.broadcast %6 : vector<1x32xf32> to vector<16x32xf32>
    %28 = arith.addf %26, %27 : vector<16x32xf32>
    %c0_10 = arith.constant 0 : index
    %c0_11 = arith.constant 0 : index
    %c0_12 = arith.constant 0 : index
    %29 = vector.load %arg2[%c0_10, %c0_11, %c0_12] : memref<1x2x8xi32, #tpu.memory_space<vmem>>, vector<1x2x8xi32>
    %30 = vector.shape_cast %29 : vector<1x2x8xi32> to vector<2x8xi32>
    %31 = arith.sitofp %30 : vector<2x8xi32> to vector<2x8xf32>
    %cst_13 = arith.constant 1.000000e+00 : f32
    %32 = vector.broadcast %cst_13 : f32 to vector<2x8xf32>
    %33 = arith.subf %31, %32 : vector<2x8xf32>
    %cst_14 = arith.constant 1.000000e+04 : f32
    %34 = vector.broadcast %cst_14 : f32 to vector<2x8xf32>
    %35 = arith.mulf %33, %34 : vector<2x8xf32>
    %36 = vector.shape_cast %35 : vector<2x8xf32> to vector<2x1x8xf32>
    %37 = arith.truncf %28 : vector<16x32xf32> to vector<16x32xbf16>
    %c0_15 = arith.constant 0 : index
    %c0_16 = arith.constant 0 : index
    %c0_17 = arith.constant 0 : index
    %c0_18 = arith.constant 0 : index
    %38 = vector.load %arg3[%c0_15, %c0_16, %c0_17, %c0_18] : memref<1x2x32x96xbf16, #tpu.memory_space<vmem>>, vector<1x1x32x96xbf16>
    %39 = vector.shape_cast %38 : vector<1x1x32x96xbf16> to vector<32x96xbf16>
    %cst_19 = arith.constant dense<0.000000e+00> : vector<16x96xf32>
    %40 = tpu.matmul %37, %39, %cst_19 {dimension_numbers = #tpu.dot_dimension_numbers<[1], [0], [0], [1], [0, 0, 1, 1], [], []>} : vector<16x32xbf16>, vector<32x96xbf16>, vector<16x96xf32> -> vector<16x96xf32>
    %41 = vector.extract_strided_slice %1 {offsets = [0, 0], sizes = [1, 96], strides = [1, 1]} : vector<19x128xf32> to vector<1x96xf32>
    %42 = vector.broadcast %41 : vector<1x96xf32> to vector<16x96xf32>
    %43 = arith.addf %40, %42 : vector<16x96xf32>
    %44 = arith.truncf %43 : vector<16x96xf32> to vector<16x96xbf16>
    %45 = vector.shape_cast %44 : vector<16x96xbf16> to vector<2x8x96xbf16>
    %46 = vector.extract_strided_slice %45 {offsets = [0, 0, 0], sizes = [2, 8, 16], strides = [1, 1, 1]} : vector<2x8x96xbf16> to vector<2x8x16xbf16>
    %47 = vector.extract_strided_slice %45 {offsets = [0, 0, 32], sizes = [2, 8, 16], strides = [1, 1, 1]} : vector<2x8x96xbf16> to vector<2x8x16xbf16>
    %48 = vector.extract_strided_slice %45 {offsets = [0, 0, 64], sizes = [2, 8, 16], strides = [1, 1, 1]} : vector<2x8x96xbf16> to vector<2x8x16xbf16>
    "tpu.trace_start"() <{level = 10 : i32, message = "bqd,bkd->bqk"}> : () -> ()
    %cst_20 = arith.constant dense<0.000000e+00> : vector<2x8x8xf32>
    %49 = tpu.matmul %46, %47, %cst_20 {dimension_numbers = #tpu.dot_dimension_numbers<[2], [2], [1], [1], [0, 0, 0, 1, 1, 1], [0], [0]>} : vector<2x8x16xbf16>, vector<2x8x16xbf16>, vector<2x8x8xf32> -> vector<2x8x8xf32>
    "tpu.trace_stop"() : () -> ()
    %50 = vector.broadcast %36 : vector<2x1x8xf32> to vector<2x8x8xf32>
    %51 = arith.addf %49, %50 : vector<2x8x8xf32>
    %cst_21 = arith.constant dense<0xFF800000> : vector<2x8xf32>
    %52 = vector.multi_reduction <maximumf>, %51, %cst_21 [2] : vector<2x8x8xf32> to vector<2x8xf32>
    %53 = vector.shape_cast %52 : vector<2x8xf32> to vector<2x8x1xf32>
    %54 = vector.broadcast %53 : vector<2x8x1xf32> to vector<2x8x8xf32>
    %55 = arith.subf %51, %54 : vector<2x8x8xf32>
    %56 = math.exp %55 : vector<2x8x8xf32>
    %cst_22 = arith.constant dense<0.000000e+00> : vector<2x8xf32>
    %57 = vector.multi_reduction <add>, %56, %cst_22 [2] : vector<2x8x8xf32> to vector<2x8xf32>
    %58 = vector.shape_cast %57 : vector<2x8xf32> to vector<2x8x1xf32>
    %59 = tpu.reciprocal %58 {approx = true} : vector<2x8x1xf32> -> vector<2x8x1xf32>
    %60 = vector.broadcast %59 : vector<2x8x1xf32> to vector<2x8x8xf32>
    %61 = arith.mulf %56, %60 : vector<2x8x8xf32>
    %62 = arith.truncf %61 : vector<2x8x8xf32> to vector<2x8x8xbf16>
    "tpu.trace_start"() <{level = 10 : i32, message = "bqk,bkd->bqd"}> : () -> ()
    %cst_23 = arith.constant dense<0.000000e+00> : vector<2x8x16xf32>
    %63 = tpu.matmul %62, %48, %cst_23 {dimension_numbers = #tpu.dot_dimension_numbers<[2], [1], [1], [2], [0, 0, 0, 1, 1, 2], [0], [0]>} : vector<2x8x8xbf16>, vector<2x8x16xbf16>, vector<2x8x16xf32> -> vector<2x8x16xf32>
    "tpu.trace_stop"() : () -> ()
    %64 = vector.shape_cast %63 : vector<2x8x16xf32> to vector<16x16xf32>
    %c0_24 = arith.constant 0 : index
    %c0_25 = arith.constant 0 : index
    %65 = vector.load %arg10[%c0_24, %c0_25] : memref<16x32xf32, #tpu.memory_space<vmem>>, vector<16x16xf32>
    tpu.vector_store %arg10[%c0_24, %c0_25], %64 {strides = array<i32>} : memref<16x32xf32, #tpu.memory_space<vmem>>, vector<16x16xf32>,
    %66 = vector.extract_strided_slice %45 {offsets = [0, 0, 16], sizes = [2, 8, 16], strides = [1, 1, 1]} : vector<2x8x96xbf16> to vector<2x8x16xbf16>
    %67 = vector.extract_strided_slice %45 {offsets = [0, 0, 48], sizes = [2, 8, 16], strides = [1, 1, 1]} : vector<2x8x96xbf16> to vector<2x8x16xbf16>
    %68 = vector.extract_strided_slice %45 {offsets = [0, 0, 80], sizes = [2, 8, 16], strides = [1, 1, 1]} : vector<2x8x96xbf16> to vector<2x8x16xbf16>
    "tpu.trace_start"() <{level = 10 : i32, message = "bqd,bkd->bqk"}> : () -> ()
    %cst_26 = arith.constant dense<0.000000e+00> : vector<2x8x8xf32>
    %69 = tpu.matmul %66, %67, %cst_26 {dimension_numbers = #tpu.dot_dimension_numbers<[2], [2], [1], [1], [0, 0, 0, 1, 1, 1], [0], [0]>} : vector<2x8x16xbf16>, vector<2x8x16xbf16>, vector<2x8x8xf32> -> vector<2x8x8xf32>
    "tpu.trace_stop"() : () -> ()
    %70 = vector.broadcast %36 : vector<2x1x8xf32> to vector<2x8x8xf32>
    %71 = arith.addf %69, %70 : vector<2x8x8xf32>
    %cst_27 = arith.constant dense<0xFF800000> : vector<2x8xf32>
    %72 = vector.multi_reduction <maximumf>, %71, %cst_27 [2] : vector<2x8x8xf32> to vector<2x8xf32>
    %73 = vector.shape_cast %72 : vector<2x8xf32> to vector<2x8x1xf32>
    %74 = vector.broadcast %73 : vector<2x8x1xf32> to vector<2x8x8xf32>
    %75 = arith.subf %71, %74 : vector<2x8x8xf32>
    %76 = math.exp %75 : vector<2x8x8xf32>
    %cst_28 = arith.constant dense<0.000000e+00> : vector<2x8xf32>
    %77 = vector.multi_reduction <add>, %76, %cst_28 [2] : vector<2x8x8xf32> to vector<2x8xf32>
    %78 = vector.shape_cast %77 : vector<2x8xf32> to vector<2x8x1xf32>
    %79 = tpu.reciprocal %78 {approx = true} : vector<2x8x1xf32> -> vector<2x8x1xf32>
    %80 = vector.broadcast %79 : vector<2x8x1xf32> to vector<2x8x8xf32>
    %81 = arith.mulf %76, %80 : vector<2x8x8xf32>
    %82 = arith.truncf %81 : vector<2x8x8xf32> to vector<2x8x8xbf16>
    "tpu.trace_start"() <{level = 10 : i32, message = "bqk,bkd->bqd"}> : () -> ()
    %cst_29 = arith.constant dense<0.000000e+00> : vector<2x8x16xf32>
    %83 = tpu.matmul %82, %68, %cst_29 {dimension_numbers = #tpu.dot_dimension_numbers<[2], [1], [1], [2], [0, 0, 0, 1, 1, 2], [0], [0]>} : vector<2x8x8xbf16>, vector<2x8x16xbf16>, vector<2x8x16xf32> -> vector<2x8x16xf32>
    "tpu.trace_stop"() : () -> ()
    %84 = vector.shape_cast %83 : vector<2x8x16xf32> to vector<16x16xf32>
    %c0_30 = arith.constant 0 : index
    %c16 = arith.constant 16 : index
    %85 = vector.load %arg10[%c0_30, %c16] : memref<16x32xf32, #tpu.memory_space<vmem>>, vector<16x16xf32>
    tpu.vector_store %arg10[%c0_30, %c16], %84 {strides = array<i32>} : memref<16x32xf32, #tpu.memory_space<vmem>>, vector<16x16xf32>,
    %c0_31 = arith.constant 0 : index
    %c0_32 = arith.constant 0 : index
    %86 = vector.load %arg10[%c0_31, %c0_32] : memref<16x32xf32, #tpu.memory_space<vmem>>, vector<16x32xf32>
    %87 = arith.truncf %86 : vector<16x32xf32> to vector<16x32xbf16>
    %c0_33 = arith.constant 0 : index
    %c0_34 = arith.constant 0 : index
    %c0_35 = arith.constant 0 : index
    %c0_36 = arith.constant 0 : index
    %88 = vector.load %arg4[%c0_33, %c0_34, %c0_35, %c0_36] : memref<1x2x32x32xbf16, #tpu.memory_space<vmem>>, vector<1x1x32x32xbf16>
    %89 = vector.shape_cast %88 : vector<1x1x32x32xbf16> to vector<32x32xbf16>
    %cst_37 = arith.constant dense<0.000000e+00> : vector<16x32xf32>
    %90 = tpu.matmul %87, %89, %cst_37 {dimension_numbers = #tpu.dot_dimension_numbers<[1], [0], [0], [1], [0, 0, 1, 1], [], []>} : vector<16x32xbf16>, vector<32x32xbf16>, vector<16x32xf32> -> vector<16x32xf32>
    %91 = vector.extract_strided_slice %1 {offsets = [1, 0], sizes = [1, 32], strides = [1, 1]} : vector<19x128xf32> to vector<1x32xf32>
    %92 = vector.broadcast %91 : vector<1x32xf32> to vector<16x32xf32>
    %93 = arith.addf %90, %92 : vector<16x32xf32>
    %94 = arith.addf %28, %93 : vector<16x32xf32>
    %95 = vector.extract_strided_slice %1 {offsets = [2, 0], sizes = [1, 32], strides = [1, 1]} : vector<19x128xf32> to vector<1x32xf32>
    %96 = vector.extract_strided_slice %1 {offsets = [3, 0], sizes = [1, 32], strides = [1, 1]} : vector<19x128xf32> to vector<1x32xf32>
    %cst_38 = arith.constant dense<0.000000e+00> : vector<16xf32>
    %97 = vector.multi_reduction <add>, %94, %cst_38 [1] : vector<16x32xf32> to vector<16xf32>
    %98 = vector.shape_cast %97 : vector<16xf32> to vector<16x1xf32>
    %cst_39 = arith.constant 3.200000e+01 : f32
    %99 = vector.broadcast %cst_39 : f32 to vector<16x1xf32>
    %100 = arith.divf %98, %99 : vector<16x1xf32>
    %101 = vector.broadcast %100 : vector<16x1xf32> to vector<16x32xf32>
    %102 = arith.subf %94, %101 : vector<16x32xf32>
    %103 = arith.mulf %102, %102 : vector<16x32xf32>
    %cst_40 = arith.constant dense<0.000000e+00> : vector<16xf32>
    %104 = vector.multi_reduction <add>, %103, %cst_40 [1] : vector<16x32xf32> to vector<16xf32>
    %105 = vector.shape_cast %104 : vector<16xf32> to vector<16x1xf32>
    %cst_41 = arith.constant 3.200000e+01 : f32
    %106 = vector.broadcast %cst_41 : f32 to vector<16x1xf32>
    %107 = arith.divf %105, %106 : vector<16x1xf32>
    %108 = vector.broadcast %100 : vector<16x1xf32> to vector<16x32xf32>
    %109 = arith.subf %94, %108 : vector<16x32xf32>
    %cst_42 = arith.constant 9.99999996E-13 : f32
    %110 = vector.broadcast %cst_42 : f32 to vector<16x1xf32>
    %111 = arith.addf %107, %110 : vector<16x1xf32>
    %112 = math.rsqrt %111 : vector<16x1xf32>
    %113 = vector.broadcast %112 : vector<16x1xf32> to vector<16x32xf32>
    %114 = arith.mulf %109, %113 : vector<16x32xf32>
    %115 = vector.broadcast %95 : vector<1x32xf32> to vector<16x32xf32>
    %116 = arith.mulf %114, %115 : vector<16x32xf32>
    %117 = vector.broadcast %96 : vector<1x32xf32> to vector<16x32xf32>
    %118 = arith.addf %116, %117 : vector<16x32xf32>
    %119 = arith.truncf %118 : vector<16x32xf32> to vector<16x32xbf16>
    %c0_43 = arith.constant 0 : index
    %c0_44 = arith.constant 0 : index
    %c0_45 = arith.constant 0 : index
    %c0_46 = arith.constant 0 : index
    %120 = vector.load %arg5[%c0_43, %c0_44, %c0_45, %c0_46] : memref<1x2x32x64xbf16, #tpu.memory_space<vmem>>, vector<1x1x32x64xbf16>
    %121 = vector.shape_cast %120 : vector<1x1x32x64xbf16> to vector<32x64xbf16>
    %cst_47 = arith.constant dense<0.000000e+00> : vector<16x64xf32>
    %122 = tpu.matmul %119, %121, %cst_47 {dimension_numbers = #tpu.dot_dimension_numbers<[1], [0], [0], [1], [0, 0, 1, 1], [], []>} : vector<16x32xbf16>, vector<32x64xbf16>, vector<16x64xf32> -> vector<16x64xf32>
    %123 = vector.extract_strided_slice %1 {offsets = [4, 0], sizes = [1, 64], strides = [1, 1]} : vector<19x128xf32> to vector<1x64xf32>
    %124 = vector.broadcast %123 : vector<1x64xf32> to vector<16x64xf32>
    %125 = arith.addf %122, %124 : vector<16x64xf32>
    %cst_48 = arith.constant 5.000000e-01 : f32
    %126 = vector.broadcast %cst_48 : f32 to vector<16x64xf32>
    %127 = arith.mulf %126, %125 : vector<16x64xf32>
    %cst_49 = arith.constant 4.471500e-02 : f32
    %128 = vector.broadcast %cst_49 : f32 to vector<16x64xf32>
    %129 = arith.mulf %128, %125 : vector<16x64xf32>
    %130 = arith.mulf %129, %125 : vector<16x64xf32>
    %131 = arith.mulf %130, %125 : vector<16x64xf32>
    %132 = arith.addf %125, %131 : vector<16x64xf32>
    %cst_50 = arith.constant 0.797884583 : f32
    %133 = vector.broadcast %cst_50 : f32 to vector<16x64xf32>
    %134 = arith.mulf %133, %132 : vector<16x64xf32>
    %135 = math.tanh %134 : vector<16x64xf32>
    %cst_51 = arith.constant 1.000000e+00 : f32
    %136 = vector.broadcast %cst_51 : f32 to vector<16x64xf32>
    %137 = arith.addf %136, %135 : vector<16x64xf32>
    %138 = arith.mulf %127, %137 : vector<16x64xf32>
    %139 = arith.truncf %138 : vector<16x64xf32> to vector<16x64xbf16>
    %c0_52 = arith.constant 0 : index
    %c0_53 = arith.constant 0 : index
    %c0_54 = arith.constant 0 : index
    %c0_55 = arith.constant 0 : index
    %140 = vector.load %arg6[%c0_52, %c0_53, %c0_54, %c0_55] : memref<1x2x64x32xbf16, #tpu.memory_space<vmem>>, vector<1x1x64x32xbf16>
    %141 = vector.shape_cast %140 : vector<1x1x64x32xbf16> to vector<64x32xbf16>
    %cst_56 = arith.constant dense<0.000000e+00> : vector<16x32xf32>
    %142 = tpu.matmul %139, %141, %cst_56 {dimension_numbers = #tpu.dot_dimension_numbers<[1], [0], [0], [1], [0, 0, 1, 1], [], []>} : vector<16x64xbf16>, vector<64x32xbf16>, vector<16x32xf32> -> vector<16x32xf32>
    %143 = vector.extract_strided_slice %1 {offsets = [5, 0], sizes = [1, 32], strides = [1, 1]} : vector<19x128xf32> to vector<1x32xf32>
    %144 = vector.broadcast %143 : vector<1x32xf32> to vector<16x32xf32>
    %145 = arith.addf %142, %144 : vector<16x32xf32>
    %146 = arith.addf %118, %145 : vector<16x32xf32>
    %147 = vector.extract_strided_slice %1 {offsets = [6, 0], sizes = [1, 32], strides = [1, 1]} : vector<19x128xf32> to vector<1x32xf32>
    %148 = vector.extract_strided_slice %1 {offsets = [7, 0], sizes = [1, 32], strides = [1, 1]} : vector<19x128xf32> to vector<1x32xf32>
    %cst_57 = arith.constant dense<0.000000e+00> : vector<16xf32>
    %149 = vector.multi_reduction <add>, %146, %cst_57 [1] : vector<16x32xf32> to vector<16xf32>
    %150 = vector.shape_cast %149 : vector<16xf32> to vector<16x1xf32>
    %cst_58 = arith.constant 3.200000e+01 : f32
    %151 = vector.broadcast %cst_58 : f32 to vector<16x1xf32>
    %152 = arith.divf %150, %151 : vector<16x1xf32>
    %153 = vector.broadcast %152 : vector<16x1xf32> to vector<16x32xf32>
    %154 = arith.subf %146, %153 : vector<16x32xf32>
    %155 = arith.mulf %154, %154 : vector<16x32xf32>
    %cst_59 = arith.constant dense<0.000000e+00> : vector<16xf32>
    %156 = vector.multi_reduction <add>, %155, %cst_59 [1] : vector<16x32xf32> to vector<16xf32>
    %157 = vector.shape_cast %156 : vector<16xf32> to vector<16x1xf32>
    %cst_60 = arith.constant 3.200000e+01 : f32
    %158 = vector.broadcast %cst_60 : f32 to vector<16x1xf32>
    %159 = arith.divf %157, %158 : vector<16x1xf32>
    %160 = vector.broadcast %152 : vector<16x1xf32> to vector<16x32xf32>
    %161 = arith.subf %146, %160 : vector<16x32xf32>
    %cst_61 = arith.constant 9.99999996E-13 : f32
    %162 = vector.broadcast %cst_61 : f32 to vector<16x1xf32>
    %163 = arith.addf %159, %162 : vector<16x1xf32>
    %164 = math.rsqrt %163 : vector<16x1xf32>
    %165 = vector.broadcast %164 : vector<16x1xf32> to vector<16x32xf32>
    %166 = arith.mulf %161, %165 : vector<16x32xf32>
    %167 = vector.broadcast %147 : vector<1x32xf32> to vector<16x32xf32>
    %168 = arith.mulf %166, %167 : vector<16x32xf32>
    %169 = vector.broadcast %148 : vector<1x32xf32> to vector<16x32xf32>
    %170 = arith.addf %168, %169 : vector<16x32xf32>
    %171 = arith.truncf %170 : vector<16x32xf32> to vector<16x32xbf16>
    %c0_62 = arith.constant 0 : index
    %c1 = arith.constant 1 : index
    %c0_63 = arith.constant 0 : index
    %c0_64 = arith.constant 0 : index
    %172 = vector.load %arg3[%c0_62, %c1, %c0_63, %c0_64] : memref<1x2x32x96xbf16, #tpu.memory_space<vmem>>, vector<1x1x32x96xbf16>
    %173 = vector.shape_cast %172 : vector<1x1x32x96xbf16> to vector<32x96xbf16>
    %cst_65 = arith.constant dense<0.000000e+00> : vector<16x96xf32>
    %174 = tpu.matmul %171, %173, %cst_65 {dimension_numbers = #tpu.dot_dimension_numbers<[1], [0], [0], [1], [0, 0, 1, 1], [], []>} : vector<16x32xbf16>, vector<32x96xbf16>, vector<16x96xf32> -> vector<16x96xf32>
    %175 = vector.extract_strided_slice %1 {offsets = [8, 0], sizes = [1, 96], strides = [1, 1]} : vector<19x128xf32> to vector<1x96xf32>
    %176 = vector.broadcast %175 : vector<1x96xf32> to vector<16x96xf32>
    %177 = arith.addf %174, %176 : vector<16x96xf32>
    %178 = arith.truncf %177 : vector<16x96xf32> to vector<16x96xbf16>
    %179 = vector.shape_cast %178 : vector<16x96xbf16> to vector<2x8x96xbf16>
    %180 = vector.extract_strided_slice %179 {offsets = [0, 0, 0], sizes = [2, 8, 16], strides = [1, 1, 1]} : vector<2x8x96xbf16> to vector<2x8x16xbf16>
    %181 = vector.extract_strided_slice %179 {offsets = [0, 0, 32], sizes = [2, 8, 16], strides = [1, 1, 1]} : vector<2x8x96xbf16> to vector<2x8x16xbf16>
    %182 = vector.extract_strided_slice %179 {offsets = [0, 0, 64], sizes = [2, 8, 16], strides = [1, 1, 1]} : vector<2x8x96xbf16> to vector<2x8x16xbf16>
    "tpu.trace_start"() <{level = 10 : i32, message = "bqd,bkd->bqk"}> : () -> ()
    %cst_66 = arith.constant dense<0.000000e+00> : vector<2x8x8xf32>
    %183 = tpu.matmul %180, %181, %cst_66 {dimension_numbers = #tpu.dot_dimension_numbers<[2], [2], [1], [1], [0, 0, 0, 1, 1, 1], [0], [0]>} : vector<2x8x16xbf16>, vector<2x8x16xbf16>, vector<2x8x8xf32> -> vector<2x8x8xf32>
    "tpu.trace_stop"() : () -> ()
    %184 = vector.broadcast %36 : vector<2x1x8xf32> to vector<2x8x8xf32>
    %185 = arith.addf %183, %184 : vector<2x8x8xf32>
    %cst_67 = arith.constant dense<0xFF800000> : vector<2x8xf32>
    %186 = vector.multi_reduction <maximumf>, %185, %cst_67 [2] : vector<2x8x8xf32> to vector<2x8xf32>
    %187 = vector.shape_cast %186 : vector<2x8xf32> to vector<2x8x1xf32>
    %188 = vector.broadcast %187 : vector<2x8x1xf32> to vector<2x8x8xf32>
    %189 = arith.subf %185, %188 : vector<2x8x8xf32>
    %190 = math.exp %189 : vector<2x8x8xf32>
    %cst_68 = arith.constant dense<0.000000e+00> : vector<2x8xf32>
    %191 = vector.multi_reduction <add>, %190, %cst_68 [2] : vector<2x8x8xf32> to vector<2x8xf32>
    %192 = vector.shape_cast %191 : vector<2x8xf32> to vector<2x8x1xf32>
    %193 = tpu.reciprocal %192 {approx = true} : vector<2x8x1xf32> -> vector<2x8x1xf32>
    %194 = vector.broadcast %193 : vector<2x8x1xf32> to vector<2x8x8xf32>
    %195 = arith.mulf %190, %194 : vector<2x8x8xf32>
    %196 = arith.truncf %195 : vector<2x8x8xf32> to vector<2x8x8xbf16>
    "tpu.trace_start"() <{level = 10 : i32, message = "bqk,bkd->bqd"}> : () -> ()
    %cst_69 = arith.constant dense<0.000000e+00> : vector<2x8x16xf32>
    %197 = tpu.matmul %196, %182, %cst_69 {dimension_numbers = #tpu.dot_dimension_numbers<[2], [1], [1], [2], [0, 0, 0, 1, 1, 2], [0], [0]>} : vector<2x8x8xbf16>, vector<2x8x16xbf16>, vector<2x8x16xf32> -> vector<2x8x16xf32>
    "tpu.trace_stop"() : () -> ()
    %198 = vector.shape_cast %197 : vector<2x8x16xf32> to vector<16x16xf32>
    %c0_70 = arith.constant 0 : index
    %c0_71 = arith.constant 0 : index
    %199 = vector.load %arg10[%c0_70, %c0_71] : memref<16x32xf32, #tpu.memory_space<vmem>>, vector<16x16xf32>
    tpu.vector_store %arg10[%c0_70, %c0_71], %198 {strides = array<i32>} : memref<16x32xf32, #tpu.memory_space<vmem>>, vector<16x16xf32>,
    %200 = vector.extract_strided_slice %179 {offsets = [0, 0, 16], sizes = [2, 8, 16], strides = [1, 1, 1]} : vector<2x8x96xbf16> to vector<2x8x16xbf16>
    %201 = vector.extract_strided_slice %179 {offsets = [0, 0, 48], sizes = [2, 8, 16], strides = [1, 1, 1]} : vector<2x8x96xbf16> to vector<2x8x16xbf16>
    %202 = vector.extract_strided_slice %179 {offsets = [0, 0, 80], sizes = [2, 8, 16], strides = [1, 1, 1]} : vector<2x8x96xbf16> to vector<2x8x16xbf16>
    "tpu.trace_start"() <{level = 10 : i32, message = "bqd,bkd->bqk"}> : () -> ()
    %cst_72 = arith.constant dense<0.000000e+00> : vector<2x8x8xf32>
    %203 = tpu.matmul %200, %201, %cst_72 {dimension_numbers = #tpu.dot_dimension_numbers<[2], [2], [1], [1], [0, 0, 0, 1, 1, 1], [0], [0]>} : vector<2x8x16xbf16>, vector<2x8x16xbf16>, vector<2x8x8xf32> -> vector<2x8x8xf32>
    "tpu.trace_stop"() : () -> ()
    %204 = vector.broadcast %36 : vector<2x1x8xf32> to vector<2x8x8xf32>
    %205 = arith.addf %203, %204 : vector<2x8x8xf32>
    %cst_73 = arith.constant dense<0xFF800000> : vector<2x8xf32>
    %206 = vector.multi_reduction <maximumf>, %205, %cst_73 [2] : vector<2x8x8xf32> to vector<2x8xf32>
    %207 = vector.shape_cast %206 : vector<2x8xf32> to vector<2x8x1xf32>
    %208 = vector.broadcast %207 : vector<2x8x1xf32> to vector<2x8x8xf32>
    %209 = arith.subf %205, %208 : vector<2x8x8xf32>
    %210 = math.exp %209 : vector<2x8x8xf32>
    %cst_74 = arith.constant dense<0.000000e+00> : vector<2x8xf32>
    %211 = vector.multi_reduction <add>, %210, %cst_74 [2] : vector<2x8x8xf32> to vector<2x8xf32>
    %212 = vector.shape_cast %211 : vector<2x8xf32> to vector<2x8x1xf32>
    %213 = tpu.reciprocal %212 {approx = true} : vector<2x8x1xf32> -> vector<2x8x1xf32>
    %214 = vector.broadcast %213 : vector<2x8x1xf32> to vector<2x8x8xf32>
    %215 = arith.mulf %210, %214 : vector<2x8x8xf32>
    %216 = arith.truncf %215 : vector<2x8x8xf32> to vector<2x8x8xbf16>
    "tpu.trace_start"() <{level = 10 : i32, message = "bqk,bkd->bqd"}> : () -> ()
    %cst_75 = arith.constant dense<0.000000e+00> : vector<2x8x16xf32>
    %217 = tpu.matmul %216, %202, %cst_75 {dimension_numbers = #tpu.dot_dimension_numbers<[2], [1], [1], [2], [0, 0, 0, 1, 1, 2], [0], [0]>} : vector<2x8x8xbf16>, vector<2x8x16xbf16>, vector<2x8x16xf32> -> vector<2x8x16xf32>
    "tpu.trace_stop"() : () -> ()
    %218 = vector.shape_cast %217 : vector<2x8x16xf32> to vector<16x16xf32>
    %c0_76 = arith.constant 0 : index
    %c16_77 = arith.constant 16 : index
    %219 = vector.load %arg10[%c0_76, %c16_77] : memref<16x32xf32, #tpu.memory_space<vmem>>, vector<16x16xf32>
    tpu.vector_store %arg10[%c0_76, %c16_77], %218 {strides = array<i32>} : memref<16x32xf32, #tpu.memory_space<vmem>>, vector<16x16xf32>,
    %c0_78 = arith.constant 0 : index
    %c0_79 = arith.constant 0 : index
    %220 = vector.load %arg10[%c0_78, %c0_79] : memref<16x32xf32, #tpu.memory_space<vmem>>, vector<16x32xf32>
    %221 = arith.truncf %220 : vector<16x32xf32> to vector<16x32xbf16>
    %c0_80 = arith.constant 0 : index
    %c1_81 = arith.constant 1 : index
    %c0_82 = arith.constant 0 : index
    %c0_83 = arith.constant 0 : index
    %222 = vector.load %arg4[%c0_80, %c1_81, %c0_82, %c0_83] : memref<1x2x32x32xbf16, #tpu.memory_space<vmem>>, vector<1x1x32x32xbf16>
    %223 = vector.shape_cast %222 : vector<1x1x32x32xbf16> to vector<32x32xbf16>
    %cst_84 = arith.constant dense<0.000000e+00> : vector<16x32xf32>
    %224 = tpu.matmul %221, %223, %cst_84 {dimension_numbers = #tpu.dot_dimension_numbers<[1], [0], [0], [1], [0, 0, 1, 1], [], []>} : vector<16x32xbf16>, vector<32x32xbf16>, vector<16x32xf32> -> vector<16x32xf32>
    %225 = vector.extract_strided_slice %1 {offsets = [9, 0], sizes = [1, 32], strides = [1, 1]} : vector<19x128xf32> to vector<1x32xf32>
    %226 = vector.broadcast %225 : vector<1x32xf32> to vector<16x32xf32>
    %227 = arith.addf %224, %226 : vector<16x32xf32>
    %228 = arith.addf %170, %227 : vector<16x32xf32>
    %229 = vector.extract_strided_slice %1 {offsets = [10, 0], sizes = [1, 32], strides = [1, 1]} : vector<19x128xf32> to vector<1x32xf32>
    %230 = vector.extract_strided_slice %1 {offsets = [11, 0], sizes = [1, 32], strides = [1, 1]} : vector<19x128xf32> to vector<1x32xf32>
    %cst_85 = arith.constant dense<0.000000e+00> : vector<16xf32>
    %231 = vector.multi_reduction <add>, %228, %cst_85 [1] : vector<16x32xf32> to vector<16xf32>
    %232 = vector.shape_cast %231 : vector<16xf32> to vector<16x1xf32>
    %cst_86 = arith.constant 3.200000e+01 : f32
    %233 = vector.broadcast %cst_86 : f32 to vector<16x1xf32>
    %234 = arith.divf %232, %233 : vector<16x1xf32>
    %235 = vector.broadcast %234 : vector<16x1xf32> to vector<16x32xf32>
    %236 = arith.subf %228, %235 : vector<16x32xf32>
    %237 = arith.mulf %236, %236 : vector<16x32xf32>
    %cst_87 = arith.constant dense<0.000000e+00> : vector<16xf32>
    %238 = vector.multi_reduction <add>, %237, %cst_87 [1] : vector<16x32xf32> to vector<16xf32>
    %239 = vector.shape_cast %238 : vector<16xf32> to vector<16x1xf32>
    %cst_88 = arith.constant 3.200000e+01 : f32
    %240 = vector.broadcast %cst_88 : f32 to vector<16x1xf32>
    %241 = arith.divf %239, %240 : vector<16x1xf32>
    %242 = vector.broadcast %234 : vector<16x1xf32> to vector<16x32xf32>
    %243 = arith.subf %228, %242 : vector<16x32xf32>
    %cst_89 = arith.constant 9.99999996E-13 : f32
    %244 = vector.broadcast %cst_89 : f32 to vector<16x1xf32>
    %245 = arith.addf %241, %244 : vector<16x1xf32>
    %246 = math.rsqrt %245 : vector<16x1xf32>
    %247 = vector.broadcast %246 : vector<16x1xf32> to vector<16x32xf32>
    %248 = arith.mulf %243, %247 : vector<16x32xf32>
    %249 = vector.broadcast %229 : vector<1x32xf32> to vector<16x32xf32>
    %250 = arith.mulf %248, %249 : vector<16x32xf32>
    %251 = vector.broadcast %230 : vector<1x32xf32> to vector<16x32xf32>
    %252 = arith.addf %250, %251 : vector<16x32xf32>
    %253 = arith.truncf %252 : vector<16x32xf32> to vector<16x32xbf16>
    %c0_90 = arith.constant 0 : index
    %c1_91 = arith.constant 1 : index
    %c0_92 = arith.constant 0 : index
    %c0_93 = arith.constant 0 : index
    %254 = vector.load %arg5[%c0_90, %c1_91, %c0_92, %c0_93] : memref<1x2x32x64xbf16, #tpu.memory_space<vmem>>, vector<1x1x32x64xbf16>
    %255 = vector.shape_cast %254 : vector<1x1x32x64xbf16> to vector<32x64xbf16>
    %cst_94 = arith.constant dense<0.000000e+00> : vector<16x64xf32>
    %256 = tpu.matmul %253, %255, %cst_94 {dimension_numbers = #tpu.dot_dimension_numbers<[1], [0], [0], [1], [0, 0, 1, 1], [], []>} : vector<16x32xbf16>, vector<32x64xbf16>, vector<16x64xf32> -> vector<16x64xf32>
    %257 = vector.extract_strided_slice %1 {offsets = [12, 0], sizes = [1, 64], strides = [1, 1]} : vector<19x128xf32> to vector<1x64xf32>
    %258 = vector.broadcast %257 : vector<1x64xf32> to vector<16x64xf32>
    %259 = arith.addf %256, %258 : vector<16x64xf32>
    %cst_95 = arith.constant 5.000000e-01 : f32
    %260 = vector.broadcast %cst_95 : f32 to vector<16x64xf32>
    %261 = arith.mulf %260, %259 : vector<16x64xf32>
    %cst_96 = arith.constant 4.471500e-02 : f32
    %262 = vector.broadcast %cst_96 : f32 to vector<16x64xf32>
    %263 = arith.mulf %262, %259 : vector<16x64xf32>
    %264 = arith.mulf %263, %259 : vector<16x64xf32>
    %265 = arith.mulf %264, %259 : vector<16x64xf32>
    %266 = arith.addf %259, %265 : vector<16x64xf32>
    %cst_97 = arith.constant 0.797884583 : f32
    %267 = vector.broadcast %cst_97 : f32 to vector<16x64xf32>
    %268 = arith.mulf %267, %266 : vector<16x64xf32>
    %269 = math.tanh %268 : vector<16x64xf32>
    %cst_98 = arith.constant 1.000000e+00 : f32
    %270 = vector.broadcast %cst_98 : f32 to vector<16x64xf32>
    %271 = arith.addf %270, %269 : vector<16x64xf32>
    %272 = arith.mulf %261, %271 : vector<16x64xf32>
    %273 = arith.truncf %272 : vector<16x64xf32> to vector<16x64xbf16>
    %c0_99 = arith.constant 0 : index
    %c1_100 = arith.constant 1 : index
    %c0_101 = arith.constant 0 : index
    %c0_102 = arith.constant 0 : index
    %274 = vector.load %arg6[%c0_99, %c1_100, %c0_101, %c0_102] : memref<1x2x64x32xbf16, #tpu.memory_space<vmem>>, vector<1x1x64x32xbf16>
    %275 = vector.shape_cast %274 : vector<1x1x64x32xbf16> to vector<64x32xbf16>
    %cst_103 = arith.constant dense<0.000000e+00> : vector<16x32xf32>
    %276 = tpu.matmul %273, %275, %cst_103 {dimension_numbers = #tpu.dot_dimension_numbers<[1], [0], [0], [1], [0, 0, 1, 1], [], []>} : vector<16x64xbf16>, vector<64x32xbf16>, vector<16x32xf32> -> vector<16x32xf32>
    %277 = vector.extract_strided_slice %1 {offsets = [13, 0], sizes = [1, 32], strides = [1, 1]} : vector<19x128xf32> to vector<1x32xf32>
    %278 = vector.broadcast %277 : vector<1x32xf32> to vector<16x32xf32>
    %279 = arith.addf %276, %278 : vector<16x32xf32>
    %280 = arith.addf %252, %279 : vector<16x32xf32>
    %281 = vector.extract_strided_slice %1 {offsets = [14, 0], sizes = [1, 32], strides = [1, 1]} : vector<19x128xf32> to vector<1x32xf32>
    %282 = vector.extract_strided_slice %1 {offsets = [15, 0], sizes = [1, 32], strides = [1, 1]} : vector<19x128xf32> to vector<1x32xf32>
    %cst_104 = arith.constant dense<0.000000e+00> : vector<16xf32>
    %283 = vector.multi_reduction <add>, %280, %cst_104 [1] : vector<16x32xf32> to vector<16xf32>
    %284 = vector.shape_cast %283 : vector<16xf32> to vector<16x1xf32>
    %cst_105 = arith.constant 3.200000e+01 : f32
    %285 = vector.broadcast %cst_105 : f32 to vector<16x1xf32>
    %286 = arith.divf %284, %285 : vector<16x1xf32>
    %287 = vector.broadcast %286 : vector<16x1xf32> to vector<16x32xf32>
    %288 = arith.subf %280, %287 : vector<16x32xf32>
    %289 = arith.mulf %288, %288 : vector<16x32xf32>
    %cst_106 = arith.constant dense<0.000000e+00> : vector<16xf32>
    %290 = vector.multi_reduction <add>, %289, %cst_106 [1] : vector<16x32xf32> to vector<16xf32>
    %291 = vector.shape_cast %290 : vector<16xf32> to vector<16x1xf32>
    %cst_107 = arith.constant 3.200000e+01 : f32
    %292 = vector.broadcast %cst_107 : f32 to vector<16x1xf32>
    %293 = arith.divf %291, %292 : vector<16x1xf32>
    %294 = vector.broadcast %286 : vector<16x1xf32> to vector<16x32xf32>
    %295 = arith.subf %280, %294 : vector<16x32xf32>
    %cst_108 = arith.constant 9.99999996E-13 : f32
    %296 = vector.broadcast %cst_108 : f32 to vector<16x1xf32>
    %297 = arith.addf %293, %296 : vector<16x1xf32>
    %298 = math.rsqrt %297 : vector<16x1xf32>
    %299 = vector.broadcast %298 : vector<16x1xf32> to vector<16x32xf32>
    %300 = arith.mulf %295, %299 : vector<16x32xf32>
    %301 = vector.broadcast %281 : vector<1x32xf32> to vector<16x32xf32>
    %302 = arith.mulf %300, %301 : vector<16x32xf32>
    %303 = vector.broadcast %282 : vector<1x32xf32> to vector<16x32xf32>
    %304 = arith.addf %302, %303 : vector<16x32xf32>
    %305 = vector.shape_cast %304 : vector<16x32xf32> to vector<2x8x32xf32>
    %cst_109 = arith.constant dense<0.000000e+00> : vector<2x32xf32>
    %306 = vector.multi_reduction <add>, %305, %cst_109 [1] : vector<2x8x32xf32> to vector<2x32xf32>
    %cst_110 = arith.constant 8.000000e+00 : f32
    %307 = vector.broadcast %cst_110 : f32 to vector<2x32xf32>
    %308 = arith.divf %306, %307 : vector<2x32xf32>
    %309 = arith.truncf %308 : vector<2x32xf32> to vector<2x32xbf16>
    %c0_111 = arith.constant 0 : index
    %c0_112 = arith.constant 0 : index
    %c0_113 = arith.constant 0 : index
    %310 = vector.load %arg7[%c0_111, %c0_112, %c0_113] : memref<1x32x128xbf16, #tpu.memory_space<vmem>>, vector<1x32x128xbf16>
    %311 = vector.shape_cast %310 : vector<1x32x128xbf16> to vector<32x128xbf16>
    %cst_114 = arith.constant dense<0.000000e+00> : vector<2x128xf32>
    %312 = tpu.matmul %309, %311, %cst_114 {dimension_numbers = #tpu.dot_dimension_numbers<[1], [0], [0], [1], [0, 0, 1, 1], [], []>} : vector<2x32xbf16>, vector<32x128xbf16>, vector<2x128xf32> -> vector<2x128xf32>
    %313 = vector.extract_strided_slice %1 {offsets = [18, 0], sizes = [1, 128], strides = [1, 1]} : vector<19x128xf32> to vector<1x128xf32>
    %314 = vector.broadcast %313 : vector<1x128xf32> to vector<2x128xf32>
    %315 = arith.addf %312, %314 : vector<2x128xf32>
    %c0_115 = arith.constant 0 : index
    %c0_116 = arith.constant 0 : index
    %c0_117 = arith.constant 0 : index
    %316 = vector.load %arg9[%c0_115, %c0_116, %c0_117] : memref<1x2x128xf32, #tpu.memory_space<vmem>>, vector<1x2x128xf32>
    %317 = vector.shape_cast %316 : vector<1x2x128xf32> to vector<2x128xf32>
    %318 = vector.shape_cast %315 : vector<2x128xf32> to vector<1x2x128xf32>
    tpu.vector_store %arg9[%c0_115, %c0_116, %c0_117], %318 {strides = array<i32>} : memref<1x2x128xf32, #tpu.memory_space<vmem>>, vector<1x2x128xf32>,
    return
  }
  func.func @transform_0(%arg0: i32) -> (i32, i32, i32, i32) {
    %c0_i32 = arith.constant 0 : i32
    %c0_i32_0 = arith.constant 0 : i32
    %c0_i32_1 = arith.constant 0 : i32
    %c0_i32_2 = arith.constant 0 : i32
    return %arg0, %c0_i32, %c0_i32_0, %c0_i32_1 : i32, i32, i32, i32
  }
  func.func @transform_1(%arg0: i32) -> (i32, i32, i32) {
    %c0_i32 = arith.constant 0 : i32
    %c0_i32_0 = arith.constant 0 : i32
    %c0_i32_1 = arith.constant 0 : i32
    return %arg0, %c0_i32, %c0_i32_0 : i32, i32, i32
  }
  func.func @transform_2(%arg0: i32) -> (i32, i32, i32, i32) {
    %c0_i32 = arith.constant 0 : i32
    %c0_i32_0 = arith.constant 0 : i32
    %c0_i32_1 = arith.constant 0 : i32
    %c0_i32_2 = arith.constant 0 : i32
    return %arg0, %c0_i32, %c0_i32_0, %c0_i32_1 : i32, i32, i32, i32
  }
  func.func @transform_3(%arg0: i32) -> (i32, i32, i32, i32) {
    %c0_i32 = arith.constant 0 : i32
    %c0_i32_0 = arith.constant 0 : i32
    %c0_i32_1 = arith.constant 0 : i32
    %c0_i32_2 = arith.constant 0 : i32
    return %arg0, %c0_i32, %c0_i32_0, %c0_i32_1 : i32, i32, i32, i32
  }
  func.func @transform_4(%arg0: i32) -> (i32, i32, i32, i32) {
    %c0_i32 = arith.constant 0 : i32
    %c0_i32_0 = arith.constant 0 : i32
    %c0_i32_1 = arith.constant 0 : i32
    %c0_i32_2 = arith.constant 0 : i32
    return %arg0, %c0_i32, %c0_i32_0, %c0_i32_1 : i32, i32, i32, i32
  }
  func.func @transform_5(%arg0: i32) -> (i32, i32, i32, i32) {
    %c0_i32 = arith.constant 0 : i32
    %c0_i32_0 = arith.constant 0 : i32
    %c0_i32_1 = arith.constant 0 : i32
    %c0_i32_2 = arith.constant 0 : i32
    return %arg0, %c0_i32, %c0_i32_0, %c0_i32_1 : i32, i32, i32, i32
  }
  func.func @transform_6(%arg0: i32) -> (i32, i32, i32) {
    %c0_i32 = arith.constant 0 : i32
    %c0_i32_0 = arith.constant 0 : i32
    %c0_i32_1 = arith.constant 0 : i32
    return %arg0, %c0_i32, %c0_i32_0 : i32, i32, i32
  }
  func.func @transform_7(%arg0: i32) -> (i32, i32, i32) {
    %c0_i32 = arith.constant 0 : i32
    %c0_i32_0 = arith.constant 0 : i32
    %c0_i32_1 = arith.constant 0 : i32
    return %arg0, %c0_i32, %c0_i32_0 : i32, i32, i32
  }
  func.func @transform_8(%arg0: i32) -> (i32, i32, i32) {
    %c0_i32 = arith.constant 0 : i32
    %c0_i32_0 = arith.constant 0 : i32
    %c0_i32_1 = arith.constant 0 : i32
    return %arg0, %c0_i32, %c0_i32_0 : i32, i32, i32
  }
}

</mosaic_0001>

<llo_original>
// kernel: bert_regressor_forward.1
$region0: #{bert_regressor_forward.1}
  #allocation0 [shape = 'u32[]', space=smem, size = 0x4, offset = 0x4, fixed_abs, tag = 'smem constant byte address 0x4 - core index']
  #allocation1 [shape = 'u32[144,128]{1,0:T(1,128)}', space=vmem, size = 0x12000, scoped, tag = 'internal scratch']
  #allocation2 [shape = 'f32[16,32]{1,0:T(8,128)}', space=vmem, size = 0x2000, scoped, tag = 'scratch operand']
  %s0 = inlined_call_operand.vmem [shape: f32[2,2,8,32], index: 0, kind: input, shape index: {}]
  %s1 = inlined_call_operand.vmem [shape: s32[2,2,8], index: 1, kind: input, shape index: {}]
  %s2 = inlined_call_operand.vmem [shape: bf16[2,2,32,96], index: 2, kind: input, shape index: {}]
  %s3 = inlined_call_operand.vmem [shape: bf16[2,2,32,32], index: 3, kind: input, shape index: {}]
  %s4 = inlined_call_operand.vmem [shape: bf16[2,2,32,64], index: 4, kind: input, shape index: {}]
  %s5 = inlined_call_operand.vmem [shape: bf16[2,2,64,32], index: 5, kind: input, shape index: {}]
  %s6 = inlined_call_operand.vmem [shape: bf16[2,32,128], index: 6, kind: input, shape index: {}]
  %s7 = inlined_call_operand.vmem [shape: f32[2,19,128], index: 7, kind: input, shape index: {}]
  %s8 = inlined_call_operand.vmem [shape: f32[2,2,128], index: 8, kind: output, shape index: {}]
  %s9 = sld [smem:[#allocation0]]
  $region65: #{bert_regressor_forward.1} parent=0
    _
  %s11 = ssub.s32 1, %s9
  %s12 = scalar_select 0, %s11, %s9
  loop: start=0, step=1, limit=4
  $region2: #{bert_regressor_forward.1} parent=0 // loop_pre_header
    _
  $region3: #{bert_regressor_forward.1} parent=0 // loop_header
    %s14 = sphi 0, %s18
    %p15 = scmp.ge.s32.totalorder %s14, 4
    %s24 = sphi 0, %s26
    %s27 = sphi 0, %s24
    %s28 = sphi 0, %s27
    %s44 = sphi 0, %s28
    %s50 = sphi 0, %s52
    %s53 = sphi 0, %s50
    %s54 = sphi 0, %s53
    %s70 = sphi 0, %s54
    %s76 = sphi 0, %s78
    %s79 = sphi 0, %s76
    %s80 = sphi 0, %s79
    %s96 = sphi 0, %s80
    %s102 = sphi 0, %s104
    %s105 = sphi 0, %s102
    %s106 = sphi 0, %s105
    %s122 = sphi 0, %s106
    %s128 = sphi 0, %s130
    %s131 = sphi 0, %s128
    %s132 = sphi 0, %s131
    %s148 = sphi 0, %s132
    %s154 = sphi 0, %s156
    %s157 = sphi 0, %s154
    %s158 = sphi 0, %s157
    %s174 = sphi 0, %s158
    %s180 = sphi 0, %s182
    %s183 = sphi 0, %s180
    %s184 = sphi 0, %s183
    %s200 = sphi 0, %s184
    %s206 = sphi 0, %s208
    %s209 = sphi 0, %s206
    %s210 = sphi 0, %s209
    %s226 = sphi 0, %s210
    %s232 = sphi 0, %s234
    %s235 = sphi 0, %s232
    %s236 = sphi 0, %s235
    %s252 = sphi 0, %s236
  $region4: #{bert_regressor_forward.1} parent=0 // loop_header_branch
    %17 = sbr.rel (%p15) target = $region8
  $region5: #{bert_regressor_forward.1} parent=0 // loop_body
    %s19 = ssub.s32 %s14, 1
    %s20 = ssub.s32 %s14, 2
    %s21 = sadd.s32 %s14, 1
    %s22 = ssub.s32 %s14, %s21
    %p23 = scmp.eq.s32.totalorder %s22, 0
    %s25 = sadd.s32 %s24, 1
    %s26 = scalar_select %p23, %s24, %s25
    %p29 = pneg %p23
    %p30 = scmp.eq.s32.totalorder %s14, 1
    %p31 = por %p29, %p30
    %p32 = scmp.ne.s32.totalorder %s24, %s27
    %p33 = scmp.eq.s32.totalorder %s14, 0
    %p34 = por %p32, %p33
    %p35 = scmp.ne.s32.totalorder %s24, %s27
    %p36 = scmp.eq.s32.totalorder %s19, 1
    %p37 = por %p35, %p36
    %p38 = scmp.ne.s32.totalorder %s27, %s28
    %p39 = scmp.eq.s32.totalorder %s19, 0
    %p40 = por %p38, %p39
    %p41 = scmp.ne.s32.totalorder %s27, %s28
    %p42 = scmp.eq.s32.totalorder %s20, 1
    %p43 = por %p41, %p42
    %p45 = scmp.ne.s32.totalorder %s28, %s44
    %p46 = scmp.eq.s32.totalorder %s20, 0
    %p47 = por %p45, %p46
    %s48 = ssub.s32 %s14, %s21
    %p49 = scmp.eq.s32.totalorder %s48, 0
    %s51 = sadd.s32 %s50, 1
    %s52 = scalar_select %p49, %s50, %s51
    %p55 = pneg %p49
    %p56 = scmp.eq.s32.totalorder %s14, 1
    %p57 = por %p55, %p56
    %p58 = scmp.ne.s32.totalorder %s50, %s53
    %p59 = scmp.eq.s32.totalorder %s14, 0
    %p60 = por %p58, %p59
    %p61 = scmp.ne.s32.totalorder %s50, %s53
    %p62 = scmp.eq.s32.totalorder %s19, 1
    %p63 = por %p61, %p62
    %p64 = scmp.ne.s32.totalorder %s53, %s54
    %p65 = scmp.eq.s32.totalorder %s19, 0
    %p66 = por %p64, %p65
    %p67 = scmp.ne.s32.totalorder %s53, %s54
    %p68 = scmp.eq.s32.totalorder %s20, 1
    %p69 = por %p67, %p68
    %p71 = scmp.ne.s32.totalorder %s54, %s70
    %p72 = scmp.eq.s32.totalorder %s20, 0
    %p73 = por %p71, %p72
    %s74 = ssub.s32 %s14, %s21
    %p75 = scmp.eq.s32.totalorder %s74, 0
    %s77 = sadd.s32 %s76, 1
    %s78 = scalar_select %p75, %s76, %s77
    %p81 = pneg %p75
    %p82 = scmp.eq.s32.totalorder %s14, 1
    %p83 = por %p81, %p82
    %p84 = scmp.ne.s32.totalorder %s76, %s79
    %p85 = scmp.eq.s32.totalorder %s14, 0
    %p86 = por %p84, %p85
    %p87 = scmp.ne.s32.totalorder %s76, %s79
    %p88 = scmp.eq.s32.totalorder %s19, 1
    %p89 = por %p87, %p88
    %p90 = scmp.ne.s32.totalorder %s79, %s80
    %p91 = scmp.eq.s32.totalorder %s19, 0
    %p92 = por %p90, %p91
    %p93 = scmp.ne.s32.totalorder %s79, %s80
    %p94 = scmp.eq.s32.totalorder %s20, 1
    %p95 = por %p93, %p94
    %p97 = scmp.ne.s32.totalorder %s80, %s96
    %p98 = scmp.eq.s32.totalorder %s20, 0
    %p99 = por %p97, %p98
    %s100 = ssub.s32 %s14, %s21
    %p101 = scmp.eq.s32.totalorder %s100, 0
    %s103 = sadd.s32 %s102, 1
    %s104 = scalar_select %p101, %s102, %s103
    %p107 = pneg %p101
    %p108 = scmp.eq.s32.totalorder %s14, 1
    %p109 = por %p107, %p108
    %p110 = scmp.ne.s32.totalorder %s102, %s105
    %p111 = scmp.eq.s32.totalorder %s14, 0
    %p112 = por %p110, %p111
    %p113 = scmp.ne.s32.totalorder %s102, %s105
    %p114 = scmp.eq.s32.totalorder %s19, 1
    %p115 = por %p113, %p114
    %p116 = scmp.ne.s32.totalorder %s105, %s106
    %p117 = scmp.eq.s32.totalorder %s19, 0
    %p118 = por %p116, %p117
    %p119 = scmp.ne.s32.totalorder %s105, %s106
    %p120 = scmp.eq.s32.totalorder %s20, 1
    %p121 = por %p119, %p120
    %p123 = scmp.ne.s32.totalorder %s106, %s122
    %p124 = scmp.eq.s32.totalorder %s20, 0
    %p125 = por %p123, %p124
    %s126 = ssub.s32 %s14, %s21
    %p127 = scmp.eq.s32.totalorder %s126, 0
    %s129 = sadd.s32 %s128, 1
    %s130 = scalar_select %p127, %s128, %s129
    %p133 = pneg %p127
    %p134 = scmp.eq.s32.totalorder %s14, 1
    %p135 = por %p133, %p134
    %p136 = scmp.ne.s32.totalorder %s128, %s131
    %p137 = scmp.eq.s32.totalorder %s14, 0
    %p138 = por %p136, %p137
    %p139 = scmp.ne.s32.totalorder %s128, %s131
    %p140 = scmp.eq.s32.totalorder %s19, 1
    %p141 = por %p139, %p140
    %p142 = scmp.ne.s32.totalorder %s131, %s132
    %p143 = scmp.eq.s32.totalorder %s19, 0
    %p144 = por %p142, %p143
    %p145 = scmp.ne.s32.totalorder %s131, %s132
    %p146 = scmp.eq.s32.totalorder %s20, 1
    %p147 = por %p145, %p146
    %p149 = scmp.ne.s32.totalorder %s132, %s148
    %p150 = scmp.eq.s32.totalorder %s20, 0
    %p151 = por %p149, %p150
    %s152 = ssub.s32 %s14, %s21
    %p153 = scmp.eq.s32.totalorder %s152, 0
    %s155 = sadd.s32 %s154, 1
    %s156 = scalar_select %p153, %s154, %s155
    %p159 = pneg %p153
    %p160 = scmp.eq.s32.totalorder %s14, 1
    %p161 = por %p159, %p160
    %p162 = scmp.ne.s32.totalorder %s154, %s157
    %p163 = scmp.eq.s32.totalorder %s14, 0
    %p164 = por %p162, %p163
    %p165 = scmp.ne.s32.totalorder %s154, %s157
    %p166 = scmp.eq.s32.totalorder %s19, 1
    %p167 = por %p165, %p166
    %p168 = scmp.ne.s32.totalorder %s157, %s158
    %p169 = scmp.eq.s32.totalorder %s19, 0
    %p170 = por %p168, %p169
    %p171 = scmp.ne.s32.totalorder %s157, %s158
    %p172 = scmp.eq.s32.totalorder %s20, 1
    %p173 = por %p171, %p172
    %p175 = scmp.ne.s32.totalorder %s158, %s174
    %p176 = scmp.eq.s32.totalorder %s20, 0
    %p177 = por %p175, %p176
    %s178 = ssub.s32 %s14, %s21
    %p179 = scmp.eq.s32.totalorder %s178, 0
    %s181 = sadd.s32 %s180, 1
    %s182 = scalar_select %p179, %s180, %s181
    %p185 = pneg %p179
    %p186 = scmp.eq.s32.totalorder %s14, 1
    %p187 = por %p185, %p186
    %p188 = scmp.ne.s32.totalorder %s180, %s183
    %p189 = scmp.eq.s32.totalorder %s14, 0
    %p190 = por %p188, %p189
    %p191 = scmp.ne.s32.totalorder %s180, %s183
    %p192 = scmp.eq.s32.totalorder %s19, 1
    %p193 = por %p191, %p192
    %p194 = scmp.ne.s32.totalorder %s183, %s184
    %p195 = scmp.eq.s32.totalorder %s19, 0
    %p196 = por %p194, %p195
    %p197 = scmp.ne.s32.totalorder %s183, %s184
    %p198 = scmp.eq.s32.totalorder %s20, 1
    %p199 = por %p197, %p198
    %p201 = scmp.ne.s32.totalorder %s184, %s200
    %p202 = scmp.eq.s32.totalorder %s20, 0
    %p203 = por %p201, %p202
    %s204 = ssub.s32 %s14, %s21
    %p205 = scmp.eq.s32.totalorder %s204, 0
    %s207 = sadd.s32 %s206, 1
    %s208 = scalar_select %p205, %s206, %s207
    %p211 = pneg %p205
    %p212 = scmp.eq.s32.totalorder %s14, 1
    %p213 = por %p211, %p212
    %p214 = scmp.ne.s32.totalorder %s206, %s209
    %p215 = scmp.eq.s32.totalorder %s14, 0
    %p216 = por %p214, %p215
    %p217 = scmp.ne.s32.totalorder %s206, %s209
    %p218 = scmp.eq.s32.totalorder %s19, 1
    %p219 = por %p217, %p218
    %p220 = scmp.ne.s32.totalorder %s209, %s210
    %p221 = scmp.eq.s32.totalorder %s19, 0
    %p222 = por %p220, %p221
    %p223 = scmp.ne.s32.totalorder %s209, %s210
    %p224 = scmp.eq.s32.totalorder %s20, 1
    %p225 = por %p223, %p224
    %p227 = scmp.ne.s32.totalorder %s210, %s226
    %p228 = scmp.eq.s32.totalorder %s20, 0
    %p229 = por %p227, %p228
    %s230 = ssub.s32 %s14, %s21
    %p231 = scmp.eq.s32.totalorder %s230, 0
    %s233 = sadd.s32 %s232, 1
    %s234 = scalar_select %p231, %s232, %s233
    %p237 = pneg %p231
    %p238 = scmp.eq.s32.totalorder %s14, 1
    %p239 = por %p237, %p238
    %p240 = scmp.ne.s32.totalorder %s232, %s235
    %p241 = scmp.eq.s32.totalorder %s14, 0
    %p242 = por %p240, %p241
    %p243 = scmp.ne.s32.totalorder %s232, %s235
    %p244 = scmp.eq.s32.totalorder %s19, 1
    %p245 = por %p243, %p244
    %p246 = scmp.ne.s32.totalorder %s235, %s236
    %p247 = scmp.eq.s32.totalorder %s19, 0
    %p248 = por %p246, %p247
    %p249 = scmp.ne.s32.totalorder %s235, %s236
    %p250 = scmp.eq.s32.totalorder %s20, 1
    %p251 = por %p249, %p250
    %p253 = scmp.ne.s32.totalorder %s236, %s252
    %p254 = scmp.eq.s32.totalorder %s20, 0
    %p255 = por %p253, %p254
    %p256 = scmp.le.s32.totalorder 1, %s14
    %p257 = scmp.lt.s32.totalorder %s14, 3
    %p258 = pnand %p256, %p257
    %p259 = pneg %p258
    // Predicated region
    $region9: #{bert_regressor_forward.1} parent=5 // pred_check
      _
    $region10: #{bert_regressor_forward.1} parent=5 // pred_check_branch
      %261 = sbr.rel (%p258) target = $region12
    $region11: #{bert_regressor_forward.1} parent=5 // pred_region
      %s262 = ssub.s32 %s14, 1
    $region12: #{bert_regressor_forward.1} parent=5 // pred_fallthru
      _
    %p263 = scmp.lt.s32.totalorder %s14, 2
    // Predicated region
    $region13: #{bert_regressor_forward.1} parent=5 // pred_check
      %p264 = pneg %p263
    $region14: #{bert_regressor_forward.1} parent=5 // pred_check_branch
      %266 = sbr.rel (%p264) target = $region16
    $region15: #{bert_regressor_forward.1} parent=5 // pred_region
      // Predicated region
      $region17: #{bert_regressor_forward.1} parent=15 // pred_check
        %p267 = pneg %p34
      $region18: #{bert_regressor_forward.1} parent=15 // pred_check_branch
        %269 = sbr.rel (%p267) target = $region20
      $region19: #{bert_regressor_forward.1} parent=15 // pred_region
        %p270 = scmp.lt.s32.totalorder %s14, 1
        %s271 = scalar_select %p270, %s14, 1
        %s272 = smul.addr %s271, 2
        %s273 = smul.addr %s272, 8
        %s274 = scalar_lea.vmem %s0, %s273
      $region20: #{bert_regressor_forward.1} parent=15 // pred_fallthru
        _
      // Predicated region
      $region21: #{bert_regressor_forward.1} parent=15 // pred_check
        %p275 = pneg %p60
      $region22: #{bert_regressor_forward.1} parent=15 // pred_check_branch
        %277 = sbr.rel (%p275) target = $region24
      $region23: #{bert_regressor_forward.1} parent=15 // pred_region
        %p278 = scmp.lt.s32.totalorder %s14, 1
        %s279 = scalar_select %p278, %s14, 1
        %s280 = smul.addr %s279, 2
        %s281 = scalar_lea.vmem %s1, %s280
      $region24: #{bert_regressor_forward.1} parent=15 // pred_fallthru
        _
      // Predicated region
      $region25: #{bert_regressor_forward.1} parent=15 // pred_check
        %p282 = pneg %p86
      $region26: #{bert_regressor_forward.1} parent=15 // pred_check_branch
        %284 = sbr.rel (%p282) target = $region28
      $region27: #{bert_regressor_forward.1} parent=15 // pred_region
        %p285 = scmp.lt.s32.totalorder %s14, 1
        %s286 = scalar_select %p285, %s14, 1
        %s287 = smul.addr %s286, 8
        %s288 = smul.addr %s287, 4
        %s289 = scalar_lea.vmem %s2, %s288
      $region28: #{bert_regressor_forward.1} parent=15 // pred_fallthru
        _
      // Predicated region
      $region29: #{bert_regressor_forward.1} parent=15 // pred_check
        %p290 = pneg %p112
      $region30: #{bert_regressor_forward.1} parent=15 // pred_check_branch
        %292 = sbr.rel (%p290) target = $region32
      $region31: #{bert_regressor_forward.1} parent=15 // pred_region
        %p293 = scmp.lt.s32.totalorder %s14, 1
        %s294 = scalar_select %p293, %s14, 1
        %s295 = smul.addr %s294, 8
        %s296 = smul.addr %s295, 4
        %s297 = scalar_lea.vmem %s3, %s296
      $region32: #{bert_regressor_forward.1} parent=15 // pred_fallthru
        _
      // Predicated region
      $region33: #{bert_regressor_forward.1} parent=15 // pred_check
        %p298 = pneg %p138
      $region34: #{bert_regressor_forward.1} parent=15 // pred_check_branch
        %300 = sbr.rel (%p298) target = $region36
      $region35: #{bert_regressor_forward.1} parent=15 // pred_region
        %p301 = scmp.lt.s32.totalorder %s14, 1
        %s302 = scalar_select %p301, %s14, 1
        %s303 = smul.addr %s302, 8
        %s304 = smul.addr %s303, 4
        %s305 = scalar_lea.vmem %s4, %s304
      $region36: #{bert_regressor_forward.1} parent=15 // pred_fallthru
        _
      // Predicated region
      $region37: #{bert_regressor_forward.1} parent=15 // pred_check
        %p306 = pneg %p164
      $region38: #{bert_regressor_forward.1} parent=15 // pred_check_branch
        %308 = sbr.rel (%p306) target = $region40
      $region39: #{bert_regressor_forward.1} parent=15 // pred_region
        %p309 = scmp.lt.s32.totalorder %s14, 1
        %s310 = scalar_select %p309, %s14, 1
        %s311 = smul.addr %s310, 16
        %s312 = smul.addr %s311, 4
        %s313 = scalar_lea.vmem %s5, %s312
      $region40: #{bert_regressor_forward.1} parent=15 // pred_fallthru
        _
      // Predicated region
      $region41: #{bert_regressor_forward.1} parent=15 // pred_check
        %p314 = pneg %p190
      $region42: #{bert_regressor_forward.1} parent=15 // pred_check_branch
        %316 = sbr.rel (%p314) target = $region44
      $region43: #{bert_regressor_forward.1} parent=15 // pred_region
        %p317 = scmp.lt.s32.totalorder %s14, 1
        %s318 = scalar_select %p317, %s14, 1
        %s319 = smul.addr %s318, 4
        %s320 = smul.addr %s319, 4
        %s321 = scalar_lea.vmem %s6, %s320
      $region44: #{bert_regressor_forward.1} parent=15 // pred_fallthru
        _
      // Predicated region
      $region45: #{bert_regressor_forward.1} parent=15 // pred_check
        %p322 = pneg %p216
      $region46: #{bert_regressor_forward.1} parent=15 // pred_check_branch
        %324 = sbr.rel (%p322) target = $region48
      $region47: #{bert_regressor_forward.1} parent=15 // pred_region
        %p325 = scmp.lt.s32.totalorder %s14, 1
        %s326 = scalar_select %p325, %s14, 1
        %s327 = smul.addr %s326, 3
        %s328 = smul.addr %s327, 8
        %s329 = scalar_lea.vmem %s7, %s328
      $region48: #{bert_regressor_forward.1} parent=15 // pred_fallthru
        _
    $region16: #{bert_regressor_forward.1} parent=5 // pred_fallthru
      _
    %p330 = scmp.le.s32.totalorder 1, %s14
    %p331 = scmp.lt.s32.totalorder %s14, 3
    %p332 = pnand %p330, %p331
    %p333 = pneg %p332
    // Predicated region
    $region49: #{bert_regressor_forward.1} parent=5 // pred_check
      _
    $region50: #{bert_regressor_forward.1} parent=5 // pred_check_branch
      %335 = sbr.rel (%p332) target = $region52
    $region51: #{bert_regressor_forward.1} parent=5 // pred_region
      %s336 = ssub.s32 %s14, 1
      %p337 = scmp.lt.s32.totalorder %s19, 1
      %s338 = scalar_select %p337, %s19, 1
      %s339 = smul.addr %s338, 2
      %s340 = smul.addr %s339, 8
      %s341 = scalar_lea.vmem %s0, %s340
      %p342 = pneg %p40
      %p343 = pneg %p37
      %p344 = scmp.lt.s32.totalorder %s19, 1
      %s345 = scalar_select %p344, %s19, 1
      %s346 = smul.addr %s345, 2
      %s347 = scalar_lea.vmem %s1, %s346
      %p348 = pneg %p66
      %p349 = pneg %p63
      %p350 = scmp.lt.s32.totalorder %s19, 1
      %s351 = scalar_select %p350, %s19, 1
      %s352 = smul.addr %s351, 8
      %s353 = smul.addr %s352, 4
      %s354 = scalar_lea.vmem %s2, %s353
      %p355 = pneg %p92
      %p356 = pneg %p89
      %p357 = scmp.lt.s32.totalorder %s19, 1
      %s358 = scalar_select %p357, %s19, 1
      %s359 = smul.addr %s358, 8
      %s360 = smul.addr %s359, 4
      %s361 = scalar_lea.vmem %s3, %s360
      %p362 = pneg %p118
      %p363 = pneg %p115
      %p364 = scmp.lt.s32.totalorder %s19, 1
      %s365 = scalar_select %p364, %s19, 1
      %s366 = smul.addr %s365, 8
      %s367 = smul.addr %s366, 4
      %s368 = scalar_lea.vmem %s4, %s367
      %p369 = pneg %p144
      %p370 = pneg %p141
      %p371 = scmp.lt.s32.totalorder %s19, 1
      %s372 = scalar_select %p371, %s19, 1
      %s373 = smul.addr %s372, 16
      %s374 = smul.addr %s373, 4
      %s375 = scalar_lea.vmem %s5, %s374
      %p376 = pneg %p170
      %p377 = pneg %p167
      %p378 = scmp.lt.s32.totalorder %s19, 1
      %s379 = scalar_select %p378, %s19, 1
      %s380 = smul.addr %s379, 4
      %s381 = smul.addr %s380, 4
      %s382 = scalar_lea.vmem %s6, %s381
      %p383 = pneg %p196
      %p384 = pneg %p193
      %p385 = scmp.lt.s32.totalorder %s19, 1
      %s386 = scalar_select %p385, %s19, 1
      %s387 = smul.addr %s386, 3
      %s388 = smul.addr %s387, 8
      %s389 = scalar_lea.vmem %s7, %s388
      %p390 = pneg %p222
      %p391 = pneg %p219
      %p392 = pneg %p248
      %p393 = pneg %p245
      %p394 = scmp.lt.s32.totalorder %s19, 1
      %s395 = scalar_select %p394, %s19, 1
      %s396 = smul.addr %s395, 2
      %s397 = scalar_lea.vmem %s8, %s396
      %p398 = scmp.lt.s32.totalorder %s19, 1
      %s399 = scalar_select %p398, %s19, 1
      %s400 = smul.addr %s399, 2
      %s401 = smul.addr %s400, 8
      %s402 = scalar_lea.vmem %s0, %s401
      %p403 = scmp.lt.s32.totalorder %s19, 1
      %s404 = scalar_select %p403, %s19, 1
      %s405 = smul.addr %s404, 2
      %s406 = scalar_lea.vmem %s1, %s405
      %p407 = scmp.lt.s32.totalorder %s19, 1
      %s408 = scalar_select %p407, %s19, 1
      %s409 = smul.addr %s408, 8
      %s410 = smul.addr %s409, 4
      %s411 = scalar_lea.vmem %s2, %s410
      %p412 = scmp.lt.s32.totalorder %s19, 1
      %s413 = scalar_select %p412, %s19, 1
      %s414 = smul.addr %s413, 8
      %s415 = smul.addr %s414, 4
      %s416 = scalar_lea.vmem %s3, %s415
      %p417 = scmp.lt.s32.totalorder %s19, 1
      %s418 = scalar_select %p417, %s19, 1
      %s419 = smul.addr %s418, 8
      %s420 = smul.addr %s419, 4
      %s421 = scalar_lea.vmem %s4, %s420
      %p422 = scmp.lt.s32.totalorder %s19, 1
      %s423 = scalar_select %p422, %s19, 1
      %s424 = smul.addr %s423, 16
      %s425 = smul.addr %s424, 4
      %s426 = scalar_lea.vmem %s5, %s425
      %p427 = scmp.lt.s32.totalorder %s19, 1
      %s428 = scalar_select %p427, %s19, 1
      %s429 = smul.addr %s428, 4
      %s430 = smul.addr %s429, 4
      %s431 = scalar_lea.vmem %s6, %s430
      %p432 = scmp.lt.s32.totalorder %s19, 1
      %s433 = scalar_select %p432, %s19, 1
      %s434 = smul.addr %s433, 3
      %s435 = smul.addr %s434, 8
      %s436 = scalar_lea.vmem %s7, %s435
      %p437 = scmp.lt.s32.totalorder %s19, 1
      %s438 = scalar_select %p437, %s19, 1
      %s439 = smul.addr %s438, 2
      %s440 = scalar_lea.vmem %s8, %s439
      %v442 = vld [vmem:[%s436] sm:$0xff]
      %v443 = vld [vmem:[%s436 + $0x8] sm:$0xff]
      %v444 = vld [vmem:[%s436 + $0x10] sm:$0x7]
      %v445 = vld [vmem:[%s402] sm:$0xff]
      %v446 = vld [vmem:[%s402 + $0x8] sm:$0xff]
      %vm447 = vcmask 261120
      %v448 = vsel %vm447, %v445, 0.0
      %449 = vadd.xlane.f32.xlu0 %v448
      %v450 = vpop.xlane.xlu0 %449
      %v451 = vsel %vm447, %v446, 0.0
      %452 = vadd.xlane.f32.xlu0 %v451
      %v453 = vpop.xlane.xlu0 %452
      %v454 = vrcp.pop 32.0
      %v455 = vmul.f32 %v450, %v454
      %v456 = vmul.f32 %v453, %v454
      %v457 = vsub.f32 %v445, %v455
      %v458 = vsub.f32 %v446, %v456
      %v459 = vmul.f32 %v457, %v457
      %v460 = vmul.f32 %v458, %v458
      %v461 = vsel %vm447, %v459, 0.0
      %462 = vadd.xlane.f32.xlu0 %v461
      %v463 = vpop.xlane.xlu0 %462
      %v464 = vsel %vm447, %v460, 0.0
      %465 = vadd.xlane.f32.xlu0 %v464
      %v466 = vpop.xlane.xlu0 %465
      %v467 = vmul.f32 %v463, %v454
      %v468 = vmul.f32 %v466, %v454
      %v469 = vadd.f32 %v467, 1e-12
      %v470 = vadd.f32 %v468, 1e-12
      %v471 = vrsqrt.pop %v469
      %v472 = vrsqrt.pop %v470
      %v473 = vmul.f32 %v457, %v471
      %v474 = vmul.f32 %v458, %v472
      %v475 = vlaneseq
      %v476 = vshrl.u32 %v475, 7
      %v477 = vsub.s32 0, %v476
      %v478 = vrot.slane %v444, %v477
      %v479 = vmul.f32 %v473, %v478
      %v480 = vmul.f32 %v474, %v478
      %v481 = vlaneseq
      %v482 = vshrl.u32 %v481, 7
      %v483 = vsub.s32 1, %v482
      %v484 = vrot.slane %v444, %v483
      %v485 = vadd.f32 %v479, %v484
      %v486 = vadd.f32 %v480, %v484
      %v487 = vld [vmem:[%s406] sm:$0x3]
      %v488 = vcvt.s32.f32 %v487
      %v489 = vsub.f32 %v488, 1.0
      %v490 = vmul.f32 %v489, 10000.0
      %v493 = vunpack.c.l.s4 1966171168
      %v494 = vunpack.c.0.s8 %v493
      %v495 = vlaneseq
      %v496 = vshrl.u32 %v495, 7
      %v497 = vsub.s32 %v494, %v496
      %v498 = vrot.slane %v490, %v497
      %v499 = vcombine.high %v498, %v498
      %v501 = vunpack.c.l.s4 1966171168
      %v502 = vunpack.c.0.s8 %v501
      %v503 = vlaneseq
      %v504 = vshrl.u32 %v503, 7
      %v505 = vsub.s32 %v502, %v504
      %v506 = vrot.slane %v498, %v505
      %v508 = vunpack.c.l.s4 1966171168
      %v509 = vunpack.c.0.s8 %v508
      %v510 = vlaneseq
      %v511 = vshrl.u32 %v510, 7
      %v512 = vsub.s32 %v509, %v511
      %v513 = vrot.slane %v499, %v512
      %v514 = vpack.c.bf16 %v486, %v485
      %v515 = vld [vmem:[%s411] sm:$0xf]
      %v516 = vld [vmem:[%s411 + $0x4] sm:$0xf]
      %v517 = vld [vmem:[%s411 + $0x8] sm:$0xf]
      %v518 = vld [vmem:[%s411 + $0xc] sm:$0xf]
      %v519 = vlaneseq
      %v520 = vshrl.u32 %v519, 7
      %v521 = vsub.s32 0, %v520
      %v522 = vrot.slane %v442, %v521
      %v527 = vunpack.c.l.b16 %v515
      %v528 = vunpack.c.l.b16 %v516
      %v529 = vunpack.c.l.b16 %v517
      %v530 = vunpack.c.l.b16 %v518
      %v531 = vpack.c.b16 %v528, %v527
      %v532 = vpack.c.b16 %v530, %v529
      %v536 = vsel %vm447, %v514, 0
      %538 = vmatprep.subr.bf16.mxu0 0
      %539 = vmatpush1.bf16.msra.mxu0 %v531
      %540 = vmatprep.subr.bf16.mxu0 0
      %541 = vmatpush1.bf16.msra.mxu0 %v532
      %542 = vmatprep.subr.bf16.mxu0 0
      %543 = vmatpush1.bf16.msra.mxu0 0
      %544 = vmatprep.subr.bf16.mxu0 0
      %545 = vmatpush1.bf16.msra.mxu0 0
      %546 = vmatprep.subr.bf16.mxu0 0
      %547 = vmatpush1.bf16.msra.mxu0 0
      %548 = vmatprep.subr.bf16.mxu0 0
      %549 = vmatpush1.bf16.msra.mxu0 0
      %550 = vmatprep.subr.bf16.mxu0 0
      %551 = vmatpush1.bf16.msra.mxu0 0
      %552 = vmatprep.subr.bf16.mxu0 0
      %553 = vmatpush1.bf16.msra.mxu0 0
      %554 = vmatprep.subr.bf16.mxu0 0
      %555 = vmatpush1.bf16.msra.mxu0 0
      %556 = vmatprep.subr.bf16.mxu0 0
      %557 = vmatpush1.bf16.msra.mxu0 0
      %558 = vmatprep.subr.bf16.mxu0 0
      %559 = vmatpush1.bf16.msra.mxu0 0
      %560 = vmatprep.subr.bf16.mxu0 0
      %561 = vmatpush1.bf16.msra.mxu0 0
      %562 = vmatprep.subr.bf16.mxu0 0
      %563 = vmatpush1.bf16.msra.mxu0 0
      %564 = vmatprep.subr.bf16.mxu0 0
      %565 = vmatpush1.bf16.msra.mxu0 0
      %566 = vmatprep.subr.bf16.mxu0 0
      %567 = vmatpush1.bf16.msra.mxu0 0
      %568 = vmatprep.subr.bf16.mxu0 0
      %569 = vmatpush1.bf16.msra.mxu0 0
      %570 = vmatprep.mubr.bf16.mxu0 0
      %571 = vmatmul.mubr.bf16.gmra.mrb[0].mxu0 %v536
      %v572 = vpop.f32.mrb[0].mxu0
      %v573 = vadd.f32 %v522, %v572
      %v574 = vpop.f32.mrb[0].mxu0
      %v575 = vpop.f32.mrb[0].mxu0
      %v576 = vadd.f32 %v522, %v575
      %v577 = vpop.f32.mrb[0].mxu0
      %578 = vdwg.mxu0
      %v579 = vpack.c.bf16 %v576, %v573
      %v581 = vunpack.c.l.b16 %v579
      %v582 = vunpack.c.h.b16 %v579
      %v583 = vpack.c.b16 %v581, %v581
      %v584 = vpack.c.b16 %v582, %v582
      %v585 = vlaneseq
      %v586 = vshrl.u32 %v585, 7
      %v587 = vsub.s32 0, %v586
      %v588 = vrot.slane %v506, %v587
      %v589 = vlaneseq
      %v590 = vshrl.u32 %v589, 7
      %v591 = vsub.s32 0, %v590
      %v592 = vrot.slane %v513, %v591
      %595 = vrot.lane.b32.xlu0 %v583, 96
      %v596 = vpop.permute.xlu0 %595
      %vm597 = vcmask 130048
      %v599 = vsel %vm597, %v583, 0
      %v602 = vsel %vm597, %v596, 0
      %604 = vmatprep.subr.bf16.mxu0 0
      %605 = vmatpush1.bf16.xpose.msra.mxu0 %v602
      %606 = vmatprep.subr.bf16.mxu0 0
      %607 = vmatpush1.bf16.xpose.msra.mxu0 0
      %608 = vmatprep.subr.bf16.mxu0 0
      %609 = vmatpush1.bf16.xpose.msra.mxu0 0
      %610 = vmatprep.subr.bf16.mxu0 0
      %611 = vmatpush1.bf16.xpose.msra.mxu0 0
      %612 = vmatprep.subr.bf16.mxu0 0
      %613 = vmatpush1.bf16.xpose.msra.mxu0 0
      %614 = vmatprep.subr.bf16.mxu0 0
      %615 = vmatpush1.bf16.xpose.msra.mxu0 0
      %616 = vmatprep.subr.bf16.mxu0 0
      %617 = vmatpush1.bf16.xpose.msra.mxu0 0
      %618 = vmatprep.subr.bf16.mxu0 0
      %619 = vmatpush1.bf16.xpose.msra.mxu0 0
      %620 = vmatprep.subr.bf16.mxu0 0
      %621 = vmatpush1.bf16.xpose.msra.mxu0 0
      %622 = vmatprep.subr.bf16.mxu0 0
      %623 = vmatpush1.bf16.xpose.msra.mxu0 0
      %624 = vmatprep.subr.bf16.mxu0 0
      %625 = vmatpush1.bf16.xpose.msra.mxu0 0
      %626 = vmatprep.subr.bf16.mxu0 0
      %627 = vmatpush1.bf16.xpose.msra.mxu0 0
      %628 = vmatprep.subr.bf16.mxu0 0
      %629 = vmatpush1.bf16.xpose.msra.mxu0 0
      %630 = vmatprep.subr.bf16.mxu0 0
      %631 = vmatpush1.bf16.xpose.msra.mxu0 0
      %632 = vmatprep.subr.bf16.mxu0 0
      %633 = vmatpush1.bf16.xpose.msra.mxu0 0
      %634 = vmatprep.subr.bf16.mxu0 0
      %635 = vmatpush1.bf16.xpose.msra.mxu0 0
      %636 = vmatprep.mubr.bf16.mxu0 0
      %637 = vmatmul.mubr.bf16.gmra.mrb[0].mxu0 %v599
      %v638 = vpop.f32.mrb[0].mxu0
      %v639 = vadd.f32 %v588, %v638
      %v640 = vpop.f32.mrb[0].mxu0
      %v641 = vpop.f32.mrb[0].mxu0
      %v642 = vpop.f32.mrb[0].mxu0
      %643 = vdwg.mxu0
      %644 = vrot.lane.b32.xlu0 %v584, 96
      %v645 = vpop.permute.xlu0 %644
      %v647 = vsel %vm597, %v584, 0
      %v650 = vsel %vm597, %v645, 0
      %652 = vmatprep.subr.bf16.mxu0 0
      %653 = vmatpush1.bf16.xpose.msra.mxu0 %v650
      %654 = vmatprep.subr.bf16.mxu0 0
      %655 = vmatpush1.bf16.xpose.msra.mxu0 0
      %656 = vmatprep.subr.bf16.mxu0 0
      %657 = vmatpush1.bf16.xpose.msra.mxu0 0
      %658 = vmatprep.subr.bf16.mxu0 0
      %659 = vmatpush1.bf16.xpose.msra.mxu0 0
      %660 = vmatprep.subr.bf16.mxu0 0
      %661 = vmatpush1.bf16.xpose.msra.mxu0 0
      %662 = vmatprep.subr.bf16.mxu0 0
      %663 = vmatpush1.bf16.xpose.msra.mxu0 0
      %664 = vmatprep.subr.bf16.mxu0 0
      %665 = vmatpush1.bf16.xpose.msra.mxu0 0
      %666 = vmatprep.subr.bf16.mxu0 0
      %667 = vmatpush1.bf16.xpose.msra.mxu0 0
      %668 = vmatprep.subr.bf16.mxu0 0
      %669 = vmatpush1.bf16.xpose.msra.mxu0 0
      %670 = vmatprep.subr.bf16.mxu0 0
      %671 = vmatpush1.bf16.xpose.msra.mxu0 0
      %672 = vmatprep.subr.bf16.mxu0 0
      %673 = vmatpush1.bf16.xpose.msra.mxu0 0
      %674 = vmatprep.subr.bf16.mxu0 0
      %675 = vmatpush1.bf16.xpose.msra.mxu0 0
      %676 = vmatprep.subr.bf16.mxu0 0
      %677 = vmatpush1.bf16.xpose.msra.mxu0 0
      %678 = vmatprep.subr.bf16.mxu0 0
      %679 = vmatpush1.bf16.xpose.msra.mxu0 0
      %680 = vmatprep.subr.bf16.mxu0 0
      %681 = vmatpush1.bf16.xpose.msra.mxu0 0
      %682 = vmatprep.subr.bf16.mxu0 0
      %683 = vmatpush1.bf16.xpose.msra.mxu0 0
      %684 = vmatprep.mubr.bf16.mxu0 0
      %685 = vmatmul.mubr.bf16.gmra.mrb[0].mxu0 %v647
      %v686 = vpop.f32.mrb[0].mxu0
      %v687 = vadd.f32 %v592, %v686
      %v688 = vpop.f32.mrb[0].mxu0
      %v689 = vpop.f32.mrb[0].mxu0
      %v690 = vpop.f32.mrb[0].mxu0
      %691 = vdwg.mxu0
      %vm692 = vcmask 64512
      %v693 = vsel %vm692, %v639, -inf
      %694 = vmax.xlane.f32.xlu0 %v693
      %v695 = vpop.xlane.xlu0 %694
      %v696 = vsel %vm692, %v687, -inf
      %697 = vmax.xlane.f32.xlu0 %v696
      %v698 = vpop.xlane.xlu0 %697
      %v699 = vsub.f32 %v639, %v695
      %v700 = vsub.f32 %v687, %v698
      %v701 = vmul.f32 %v699, 1.442695
      %v702 = vpow.pop %v701
      %v703 = vmul.f32 %v700, 1.442695
      %v704 = vpow.pop %v703
      %v705 = vsel %vm692, %v702, 0.0
      %706 = vadd.xlane.f32.xlu0 %v705
      %v707 = vpop.xlane.xlu0 %706
      %v708 = vsel %vm692, %v704, 0.0
      %709 = vadd.xlane.f32.xlu0 %v708
      %v710 = vpop.xlane.xlu0 %709
      %v711 = vrcp.pop %v707
      %v712 = vrcp.pop %v710
      %v713 = vmul.f32 %v702, %v711
      %v714 = vmul.f32 %v704, %v712
      %v715 = vpack.c.bf16 %v713, %v713
      %v716 = vpack.c.bf16 %v714, %v714
      %717 = vrot.lane.b32.xlu0 %v583, 64
      %v718 = vpop.permute.xlu0 %717
      %v720 = vsel %vm692, %v715, 0
      %vm722 = vcmask 1043456
      %v724 = vsel %vm722, %v718, 0
      %726 = vmatprep.subr.bf16.mxu0 0
      %727 = vmatpush1.bf16.msra.mxu0 %v724
      %728 = vmatprep.subr.bf16.mxu0 0
      %729 = vmatpush1.bf16.msra.mxu0 0
      %730 = vmatprep.subr.bf16.mxu0 0
      %731 = vmatpush1.bf16.msra.mxu0 0
      %732 = vmatprep.subr.bf16.mxu0 0
      %733 = vmatpush1.bf16.msra.mxu0 0
      %734 = vmatprep.subr.bf16.mxu0 0
      %735 = vmatpush1.bf16.msra.mxu0 0
      %736 = vmatprep.subr.bf16.mxu0 0
      %737 = vmatpush1.bf16.msra.mxu0 0
      %738 = vmatprep.subr.bf16.mxu0 0
      %739 = vmatpush1.bf16.msra.mxu0 0
      %740 = vmatprep.subr.bf16.mxu0 0
      %741 = vmatpush1.bf16.msra.mxu0 0
      %742 = vmatprep.subr.bf16.mxu0 0
      %743 = vmatpush1.bf16.msra.mxu0 0
      %744 = vmatprep.subr.bf16.mxu0 0
      %745 = vmatpush1.bf16.msra.mxu0 0
      %746 = vmatprep.subr.bf16.mxu0 0
      %747 = vmatpush1.bf16.msra.mxu0 0
      %748 = vmatprep.subr.bf16.mxu0 0
      %749 = vmatpush1.bf16.msra.mxu0 0
      %750 = vmatprep.subr.bf16.mxu0 0
      %751 = vmatpush1.bf16.msra.mxu0 0
      %752 = vmatprep.subr.bf16.mxu0 0
      %753 = vmatpush1.bf16.msra.mxu0 0
      %754 = vmatprep.subr.bf16.mxu0 0
      %755 = vmatpush1.bf16.msra.mxu0 0
      %756 = vmatprep.subr.bf16.mxu0 0
      %757 = vmatpush1.bf16.msra.mxu0 0
      %758 = vmatprep.mubr.bf16.mxu0 0
      %759 = vmatmul.mubr.bf16.gmra.mrb[0].mxu0 %v720
      %v760 = vpop.f32.mrb[0].mxu0
      %v761 = vadd.f32 0.0, %v760
      %v762 = vpop.f32.mrb[0].mxu0
      %v763 = vpop.f32.mrb[0].mxu0
      %v764 = vpop.f32.mrb[0].mxu0
      %765 = vdwg.mxu0
      %766 = vrot.lane.b32.xlu0 %v584, 64
      %v767 = vpop.permute.xlu0 %766
      %v769 = vsel %vm692, %v716, 0
      %v772 = vsel %vm722, %v767, 0
      %774 = vmatprep.subr.bf16.mxu0 0
      %775 = vmatpush1.bf16.msra.mxu0 %v772
      %776 = vmatprep.subr.bf16.mxu0 0
      %777 = vmatpush1.bf16.msra.mxu0 0
      %778 = vmatprep.subr.bf16.mxu0 0
      %779 = vmatpush1.bf16.msra.mxu0 0
      %780 = vmatprep.subr.bf16.mxu0 0
      %781 = vmatpush1.bf16.msra.mxu0 0
      %782 = vmatprep.subr.bf16.mxu0 0
      %783 = vmatpush1.bf16.msra.mxu0 0
      %784 = vmatprep.subr.bf16.mxu0 0
      %785 = vmatpush1.bf16.msra.mxu0 0
      %786 = vmatprep.subr.bf16.mxu0 0
      %787 = vmatpush1.bf16.msra.mxu0 0
      %788 = vmatprep.subr.bf16.mxu0 0
      %789 = vmatpush1.bf16.msra.mxu0 0
      %790 = vmatprep.subr.bf16.mxu0 0
      %791 = vmatpush1.bf16.msra.mxu0 0
      %792 = vmatprep.subr.bf16.mxu0 0
      %793 = vmatpush1.bf16.msra.mxu0 0
      %794 = vmatprep.subr.bf16.mxu0 0
      %795 = vmatpush1.bf16.msra.mxu0 0
      %796 = vmatprep.subr.bf16.mxu0 0
      %797 = vmatpush1.bf16.msra.mxu0 0
      %798 = vmatprep.subr.bf16.mxu0 0
      %799 = vmatpush1.bf16.msra.mxu0 0
      %800 = vmatprep.subr.bf16.mxu0 0
      %801 = vmatpush1.bf16.msra.mxu0 0
      %802 = vmatprep.subr.bf16.mxu0 0
      %803 = vmatpush1.bf16.msra.mxu0 0
      %804 = vmatprep.subr.bf16.mxu0 0
      %805 = vmatpush1.bf16.msra.mxu0 0
      %806 = vmatprep.mubr.bf16.mxu0 0
      %807 = vmatmul.mubr.bf16.gmra.mrb[0].mxu0 %v769
      %v808 = vpop.f32.mrb[0].mxu0
      %v809 = vadd.f32 0.0, %v808
      %v810 = vpop.f32.mrb[0].mxu0
      %v811 = vpop.f32.mrb[0].mxu0
      %v812 = vpop.f32.mrb[0].mxu0
      %813 = vdwg.mxu0
      %814 = vst.msk [vmem:[#allocation2] sm:$0xff] %vm597, %v761
      %815 = vst.msk [vmem:[#allocation2 + $0x8] sm:$0xff] %vm597, %v809
      %816 = vrot.lane.b32.xlu0 %v583, 112
      %v817 = vpop.permute.xlu0 %816
      %818 = vrot.lane.b32.xlu0 %v583, 80
      %v819 = vpop.permute.xlu0 %818
      %v821 = vsel %vm597, %v817, 0
      %v824 = vsel %vm597, %v819, 0
      %826 = vmatprep.subr.bf16.mxu0 0
      %827 = vmatpush1.bf16.xpose.msra.mxu0 %v824
      %828 = vmatprep.subr.bf16.mxu0 0
      %829 = vmatpush1.bf16.xpose.msra.mxu0 0
      %830 = vmatprep.subr.bf16.mxu0 0
      %831 = vmatpush1.bf16.xpose.msra.mxu0 0
      %832 = vmatprep.subr.bf16.mxu0 0
      %833 = vmatpush1.bf16.xpose.msra.mxu0 0
      %834 = vmatprep.subr.bf16.mxu0 0
      %835 = vmatpush1.bf16.xpose.msra.mxu0 0
      %836 = vmatprep.subr.bf16.mxu0 0
      %837 = vmatpush1.bf16.xpose.msra.mxu0 0
      %838 = vmatprep.subr.bf16.mxu0 0
      %839 = vmatpush1.bf16.xpose.msra.mxu0 0
      %840 = vmatprep.subr.bf16.mxu0 0
      %841 = vmatpush1.bf16.xpose.msra.mxu0 0
      %842 = vmatprep.subr.bf16.mxu0 0
      %843 = vmatpush1.bf16.xpose.msra.mxu0 0
      %844 = vmatprep.subr.bf16.mxu0 0
      %845 = vmatpush1.bf16.xpose.msra.mxu0 0
      %846 = vmatprep.subr.bf16.mxu0 0
      %847 = vmatpush1.bf16.xpose.msra.mxu0 0
      %848 = vmatprep.subr.bf16.mxu0 0
      %849 = vmatpush1.bf16.xpose.msra.mxu0 0
      %850 = vmatprep.subr.bf16.mxu0 0
      %851 = vmatpush1.bf16.xpose.msra.mxu0 0
      %852 = vmatprep.subr.bf16.mxu0 0
      %853 = vmatpush1.bf16.xpose.msra.mxu0 0
      %854 = vmatprep.subr.bf16.mxu0 0
      %855 = vmatpush1.bf16.xpose.msra.mxu0 0
      %856 = vmatprep.subr.bf16.mxu0 0
      %857 = vmatpush1.bf16.xpose.msra.mxu0 0
      %858 = vmatprep.mubr.bf16.mxu0 0
      %859 = vmatmul.mubr.bf16.gmra.mrb[0].mxu0 %v821
      %v860 = vpop.f32.mrb[0].mxu0
      %v861 = vadd.f32 %v588, %v860
      %v862 = vpop.f32.mrb[0].mxu0
      %v863 = vpop.f32.mrb[0].mxu0
      %v864 = vpop.f32.mrb[0].mxu0
      %865 = vdwg.mxu0
      %866 = vrot.lane.b32.xlu0 %v584, 112
      %v867 = vpop.permute.xlu0 %866
      %868 = vrot.lane.b32.xlu0 %v584, 80
      %v869 = vpop.permute.xlu0 %868
      %v871 = vsel %vm597, %v867, 0
      %v874 = vsel %vm597, %v869, 0
      %876 = vmatprep.subr.bf16.mxu0 0
      %877 = vmatpush1.bf16.xpose.msra.mxu0 %v874
      %878 = vmatprep.subr.bf16.mxu0 0
      %879 = vmatpush1.bf16.xpose.msra.mxu0 0
      %880 = vmatprep.subr.bf16.mxu0 0
      %881 = vmatpush1.bf16.xpose.msra.mxu0 0
      %882 = vmatprep.subr.bf16.mxu0 0
      %883 = vmatpush1.bf16.xpose.msra.mxu0 0
      %884 = vmatprep.subr.bf16.mxu0 0
      %885 = vmatpush1.bf16.xpose.msra.mxu0 0
      %886 = vmatprep.subr.bf16.mxu0 0
      %887 = vmatpush1.bf16.xpose.msra.mxu0 0
      %888 = vmatprep.subr.bf16.mxu0 0
      %889 = vmatpush1.bf16.xpose.msra.mxu0 0
      %890 = vmatprep.subr.bf16.mxu0 0
      %891 = vmatpush1.bf16.xpose.msra.mxu0 0
      %892 = vmatprep.subr.bf16.mxu0 0
      %893 = vmatpush1.bf16.xpose.msra.mxu0 0
      %894 = vmatprep.subr.bf16.mxu0 0
      %895 = vmatpush1.bf16.xpose.msra.mxu0 0
      %896 = vmatprep.subr.bf16.mxu0 0
      %897 = vmatpush1.bf16.xpose.msra.mxu0 0
      %898 = vmatprep.subr.bf16.mxu0 0
      %899 = vmatpush1.bf16.xpose.msra.mxu0 0
      %900 = vmatprep.subr.bf16.mxu0 0
      %901 = vmatpush1.bf16.xpose.msra.mxu0 0
      %902 = vmatprep.subr.bf16.mxu0 0
      %903 = vmatpush1.bf16.xpose.msra.mxu0 0
      %904 = vmatprep.subr.bf16.mxu0 0
      %905 = vmatpush1.bf16.xpose.msra.mxu0 0
      %906 = vmatprep.subr.bf16.mxu0 0
      %907 = vmatpush1.bf16.xpose.msra.mxu0 0
      %908 = vmatprep.mubr.bf16.mxu0 0
      %909 = vmatmul.mubr.bf16.gmra.mrb[0].mxu0 %v871
      %v910 = vpop.f32.mrb[0].mxu0
      %v911 = vadd.f32 %v592, %v910
      %v912 = vpop.f32.mrb[0].mxu0
      %v913 = vpop.f32.mrb[0].mxu0
      %v914 = vpop.f32.mrb[0].mxu0
      %915 = vdwg.mxu0
      %v916 = vsel %vm692, %v861, -inf
      %917 = vmax.xlane.f32.xlu0 %v916
      %v918 = vpop.xlane.xlu0 %917
      %v919 = vsel %vm692, %v911, -inf
      %920 = vmax.xlane.f32.xlu0 %v919
      %v921 = vpop.xlane.xlu0 %920
      %v922 = vsub.f32 %v861, %v918
      %v923 = vsub.f32 %v911, %v921
      %v924 = vmul.f32 %v922, 1.442695
      %v925 = vpow.pop %v924
      %v926 = vmul.f32 %v923, 1.442695
      %v927 = vpow.pop %v926
      %v928 = vsel %vm692, %v925, 0.0
      %929 = vadd.xlane.f32.xlu0 %v928
      %v930 = vpop.xlane.xlu0 %929
      %v931 = vsel %vm692, %v927, 0.0
      %932 = vadd.xlane.f32.xlu0 %v931
      %v933 = vpop.xlane.xlu0 %932
      %v934 = vrcp.pop %v930
      %v935 = vrcp.pop %v933
      %v936 = vmul.f32 %v925, %v934
      %v937 = vmul.f32 %v927, %v935
      %v938 = vpack.c.bf16 %v936, %v936
      %v939 = vpack.c.bf16 %v937, %v937
      %940 = vrot.lane.b32.xlu0 %v583, 48
      %v941 = vpop.permute.xlu0 %940
      %v943 = vsel %vm692, %v938, 0
      %v946 = vsel %vm722, %v941, 0
      %948 = vmatprep.subr.bf16.mxu0 0
      %949 = vmatpush1.bf16.msra.mxu0 %v946
      %950 = vmatprep.subr.bf16.mxu0 0
      %951 = vmatpush1.bf16.msra.mxu0 0
      %952 = vmatprep.subr.bf16.mxu0 0
      %953 = vmatpush1.bf16.msra.mxu0 0
      %954 = vmatprep.subr.bf16.mxu0 0
      %955 = vmatpush1.bf16.msra.mxu0 0
      %956 = vmatprep.subr.bf16.mxu0 0
      %957 = vmatpush1.bf16.msra.mxu0 0
      %958 = vmatprep.subr.bf16.mxu0 0
      %959 = vmatpush1.bf16.msra.mxu0 0
      %960 = vmatprep.subr.bf16.mxu0 0
      %961 = vmatpush1.bf16.msra.mxu0 0
      %962 = vmatprep.subr.bf16.mxu0 0
      %963 = vmatpush1.bf16.msra.mxu0 0
      %964 = vmatprep.subr.bf16.mxu0 0
      %965 = vmatpush1.bf16.msra.mxu0 0
      %966 = vmatprep.subr.bf16.mxu0 0
      %967 = vmatpush1.bf16.msra.mxu0 0
      %968 = vmatprep.subr.bf16.mxu0 0
      %969 = vmatpush1.bf16.msra.mxu0 0
      %970 = vmatprep.subr.bf16.mxu0 0
      %971 = vmatpush1.bf16.msra.mxu0 0
      %972 = vmatprep.subr.bf16.mxu0 0
      %973 = vmatpush1.bf16.msra.mxu0 0
      %974 = vmatprep.subr.bf16.mxu0 0
      %975 = vmatpush1.bf16.msra.mxu0 0
      %976 = vmatprep.subr.bf16.mxu0 0
      %977 = vmatpush1.bf16.msra.mxu0 0
      %978 = vmatprep.subr.bf16.mxu0 0
      %979 = vmatpush1.bf16.msra.mxu0 0
      %980 = vmatprep.mubr.bf16.mxu0 0
      %981 = vmatmul.mubr.bf16.gmra.mrb[0].mxu0 %v943
      %v982 = vpop.f32.mrb[0].mxu0
      %v983 = vadd.f32 0.0, %v982
      %v984 = vpop.f32.mrb[0].mxu0
      %v985 = vpop.f32.mrb[0].mxu0
      %v986 = vpop.f32.mrb[0].mxu0
      %987 = vdwg.mxu0
      %988 = vrot.lane.b32.xlu0 %v584, 48
      %v989 = vpop.permute.xlu0 %988
      %v991 = vsel %vm692, %v939, 0
      %v994 = vsel %vm722, %v989, 0
      %996 = vmatprep.subr.bf16.mxu0 0
      %997 = vmatpush1.bf16.msra.mxu0 %v994
      %998 = vmatprep.subr.bf16.mxu0 0
      %999 = vmatpush1.bf16.msra.mxu0 0
      %1000 = vmatprep.subr.bf16.mxu0 0
      %1001 = vmatpush1.bf16.msra.mxu0 0
      %1002 = vmatprep.subr.bf16.mxu0 0
      %1003 = vmatpush1.bf16.msra.mxu0 0
      %1004 = vmatprep.subr.bf16.mxu0 0
      %1005 = vmatpush1.bf16.msra.mxu0 0
      %1006 = vmatprep.subr.bf16.mxu0 0
      %1007 = vmatpush1.bf16.msra.mxu0 0
      %1008 = vmatprep.subr.bf16.mxu0 0
      %1009 = vmatpush1.bf16.msra.mxu0 0
      %1010 = vmatprep.subr.bf16.mxu0 0
      %1011 = vmatpush1.bf16.msra.mxu0 0
      %1012 = vmatprep.subr.bf16.mxu0 0
      %1013 = vmatpush1.bf16.msra.mxu0 0
      %1014 = vmatprep.subr.bf16.mxu0 0
      %1015 = vmatpush1.bf16.msra.mxu0 0
      %1016 = vmatprep.subr.bf16.mxu0 0
      %1017 = vmatpush1.bf16.msra.mxu0 0
      %1018 = vmatprep.subr.bf16.mxu0 0
      %1019 = vmatpush1.bf16.msra.mxu0 0
      %1020 = vmatprep.subr.bf16.mxu0 0
      %1021 = vmatpush1.bf16.msra.mxu0 0
      %1022 = vmatprep.subr.bf16.mxu0 0
      %1023 = vmatpush1.bf16.msra.mxu0 0
      %1024 = vmatprep.subr.bf16.mxu0 0
      %1025 = vmatpush1.bf16.msra.mxu0 0
      %1026 = vmatprep.subr.bf16.mxu0 0
      %1027 = vmatpush1.bf16.msra.mxu0 0
      %1028 = vmatprep.mubr.bf16.mxu0 0
      %1029 = vmatmul.mubr.bf16.gmra.mrb[0].mxu0 %v991
      %v1030 = vpop.f32.mrb[0].mxu0
      %v1031 = vadd.f32 0.0, %v1030
      %v1032 = vpop.f32.mrb[0].mxu0
      %v1033 = vpop.f32.mrb[0].mxu0
      %v1034 = vpop.f32.mrb[0].mxu0
      %1035 = vdwg.mxu0
      %1038 = vrot.lane.b32.xlu0 %v983, 16
      %v1039 = vpop.permute.xlu0 %1038
      %1040 = vrot.lane.b32.xlu0 %v1031, 16
      %v1041 = vpop.permute.xlu0 %1040
      %vm1044 = vcmask 261248
      %1045 = vst.msk [vmem:[#allocation2] sm:$0xff] %vm1044, %v1039
      %1046 = vst.msk [vmem:[#allocation2 + $0x8] sm:$0xff] %vm1044, %v1041
      %v1047 = vld [vmem:[#allocation2] sm:$0xff]
      %v1048 = vld [vmem:[#allocation2 + $0x8] sm:$0xff]
      %v1049 = vpack.c.bf16 %v1048, %v1047
      %v1050 = vld [vmem:[%s416] sm:$0xf]
      %v1051 = vld [vmem:[%s416 + $0x4] sm:$0xf]
      %v1052 = vld [vmem:[%s416 + $0x8] sm:$0xf]
      %v1053 = vld [vmem:[%s416 + $0xc] sm:$0xf]
      %v1054 = vlaneseq
      %v1055 = vshrl.u32 %v1054, 7
      %v1056 = vsub.s32 1, %v1055
      %v1057 = vrot.slane %v442, %v1056
      %v1062 = vunpack.c.l.b16 %v1050
      %v1063 = vunpack.c.l.b16 %v1051
      %v1064 = vunpack.c.l.b16 %v1052
      %v1065 = vunpack.c.l.b16 %v1053
      %v1066 = vpack.c.b16 %v1063, %v1062
      %v1067 = vpack.c.b16 %v1065, %v1064
      %v1071 = vsel %vm447, %v1049, 0
      %1073 = vmatprep.subr.bf16.mxu0 0
      %1074 = vmatpush1.bf16.msra.mxu0 %v1066
      %1075 = vmatprep.subr.bf16.mxu0 0
      %1076 = vmatpush1.bf16.msra.mxu0 %v1067
      %1077 = vmatprep.subr.bf16.mxu0 0
      %1078 = vmatpush1.bf16.msra.mxu0 0
      %1079 = vmatprep.subr.bf16.mxu0 0
      %1080 = vmatpush1.bf16.msra.mxu0 0
      %1081 = vmatprep.subr.bf16.mxu0 0
      %1082 = vmatpush1.bf16.msra.mxu0 0
      %1083 = vmatprep.subr.bf16.mxu0 0
      %1084 = vmatpush1.bf16.msra.mxu0 0
      %1085 = vmatprep.subr.bf16.mxu0 0
      %1086 = vmatpush1.bf16.msra.mxu0 0
      %1087 = vmatprep.subr.bf16.mxu0 0
      %1088 = vmatpush1.bf16.msra.mxu0 0
      %1089 = vmatprep.subr.bf16.mxu0 0
      %1090 = vmatpush1.bf16.msra.mxu0 0
      %1091 = vmatprep.subr.bf16.mxu0 0
      %1092 = vmatpush1.bf16.msra.mxu0 0
      %1093 = vmatprep.subr.bf16.mxu0 0
      %1094 = vmatpush1.bf16.msra.mxu0 0
      %1095 = vmatprep.subr.bf16.mxu0 0
      %1096 = vmatpush1.bf16.msra.mxu0 0
      %1097 = vmatprep.subr.bf16.mxu0 0
      %1098 = vmatpush1.bf16.msra.mxu0 0
      %1099 = vmatprep.subr.bf16.mxu0 0
      %1100 = vmatpush1.bf16.msra.mxu0 0
      %1101 = vmatprep.subr.bf16.mxu0 0
      %1102 = vmatpush1.bf16.msra.mxu0 0
      %1103 = vmatprep.subr.bf16.mxu0 0
      %1104 = vmatpush1.bf16.msra.mxu0 0
      %1105 = vmatprep.mubr.bf16.mxu0 0
      %1106 = vmatmul.mubr.bf16.gmra.mrb[0].mxu0 %v1071
      %v1107 = vpop.f32.mrb[0].mxu0
      %v1108 = vadd.f32 %v1057, %v1107
      %v1109 = vpop.f32.mrb[0].mxu0
      %v1110 = vpop.f32.mrb[0].mxu0
      %v1111 = vadd.f32 %v1057, %v1110
      %v1112 = vpop.f32.mrb[0].mxu0
      %1113 = vdwg.mxu0
      %v1114 = vadd.f32 %v485, %v1108
      %v1115 = vadd.f32 %v486, %v1111
      %v1116 = vsel %vm447, %v1114, 0.0
      %1117 = vadd.xlane.f32.xlu0 %v1116
      %v1118 = vpop.xlane.xlu0 %1117
      %v1119 = vsel %vm447, %v1115, 0.0
      %1120 = vadd.xlane.f32.xlu0 %v1119
      %v1121 = vpop.xlane.xlu0 %1120
      %v1122 = vmul.f32 %v1118, %v454
      %v1123 = vmul.f32 %v1121, %v454
      %v1124 = vsub.f32 %v1114, %v1122
      %v1125 = vsub.f32 %v1115, %v1123
      %v1126 = vmul.f32 %v1124, %v1124
      %v1127 = vmul.f32 %v1125, %v1125
      %v1128 = vsel %vm447, %v1126, 0.0
      %1129 = vadd.xlane.f32.xlu0 %v1128
      %v1130 = vpop.xlane.xlu0 %1129
      %v1131 = vsel %vm447, %v1127, 0.0
      %1132 = vadd.xlane.f32.xlu0 %v1131
      %v1133 = vpop.xlane.xlu0 %1132
      %v1134 = vmul.f32 %v1130, %v454
      %v1135 = vmul.f32 %v1133, %v454
      %v1136 = vadd.f32 %v1134, 1e-12
      %v1137 = vadd.f32 %v1135, 1e-12
      %v1138 = vrsqrt.pop %v1136
      %v1139 = vrsqrt.pop %v1137
      %v1140 = vmul.f32 %v1124, %v1138
      %v1141 = vmul.f32 %v1125, %v1139
      %v1142 = vlaneseq
      %v1143 = vshrl.u32 %v1142, 7
      %v1144 = vsub.s32 2, %v1143
      %v1145 = vrot.slane %v442, %v1144
      %v1146 = vmul.f32 %v1140, %v1145
      %v1147 = vmul.f32 %v1141, %v1145
      %v1148 = vlaneseq
      %v1149 = vshrl.u32 %v1148, 7
      %v1150 = vsub.s32 3, %v1149
      %v1151 = vrot.slane %v442, %v1150
      %v1152 = vadd.f32 %v1146, %v1151
      %v1153 = vadd.f32 %v1147, %v1151
      %v1154 = vpack.c.bf16 %v1153, %v1152
      %v1155 = vld [vmem:[%s421] sm:$0xf]
      %v1156 = vld [vmem:[%s421 + $0x4] sm:$0xf]
      %v1157 = vld [vmem:[%s421 + $0x8] sm:$0xf]
      %v1158 = vld [vmem:[%s421 + $0xc] sm:$0xf]
      %v1159 = vlaneseq
      %v1160 = vshrl.u32 %v1159, 7
      %v1161 = vsub.s32 4, %v1160
      %v1162 = vrot.slane %v442, %v1161
      %v1167 = vunpack.c.l.b16 %v1155
      %v1168 = vunpack.c.l.b16 %v1156
      %v1169 = vunpack.c.l.b16 %v1157
      %v1170 = vunpack.c.l.b16 %v1158
      %v1171 = vpack.c.b16 %v1168, %v1167
      %v1172 = vpack.c.b16 %v1170, %v1169
      %v1176 = vsel %vm447, %v1154, 0
      %1178 = vmatprep.subr.bf16.mxu0 0
      %1179 = vmatpush1.bf16.msra.mxu0 %v1171
      %1180 = vmatprep.subr.bf16.mxu0 0
      %1181 = vmatpush1.bf16.msra.mxu0 %v1172
      %1182 = vmatprep.subr.bf16.mxu0 0
      %1183 = vmatpush1.bf16.msra.mxu0 0
      %1184 = vmatprep.subr.bf16.mxu0 0
      %1185 = vmatpush1.bf16.msra.mxu0 0
      %1186 = vmatprep.subr.bf16.mxu0 0
      %1187 = vmatpush1.bf16.msra.mxu0 0
      %1188 = vmatprep.subr.bf16.mxu0 0
      %1189 = vmatpush1.bf16.msra.mxu0 0
      %1190 = vmatprep.subr.bf16.mxu0 0
      %1191 = vmatpush1.bf16.msra.mxu0 0
      %1192 = vmatprep.subr.bf16.mxu0 0
      %1193 = vmatpush1.bf16.msra.mxu0 0
      %1194 = vmatprep.subr.bf16.mxu0 0
      %1195 = vmatpush1.bf16.msra.mxu0 0
      %1196 = vmatprep.subr.bf16.mxu0 0
      %1197 = vmatpush1.bf16.msra.mxu0 0
      %1198 = vmatprep.subr.bf16.mxu0 0
      %1199 = vmatpush1.bf16.msra.mxu0 0
      %1200 = vmatprep.subr.bf16.mxu0 0
      %1201 = vmatpush1.bf16.msra.mxu0 0
      %1202 = vmatprep.subr.bf16.mxu0 0
      %1203 = vmatpush1.bf16.msra.mxu0 0
      %1204 = vmatprep.subr.bf16.mxu0 0
      %1205 = vmatpush1.bf16.msra.mxu0 0
      %1206 = vmatprep.subr.bf16.mxu0 0
      %1207 = vmatpush1.bf16.msra.mxu0 0
      %1208 = vmatprep.subr.bf16.mxu0 0
      %1209 = vmatpush1.bf16.msra.mxu0 0
      %1210 = vmatprep.mubr.bf16.mxu0 0
      %1211 = vmatmul.mubr.bf16.gmra.mrb[0].mxu0 %v1176
      %v1212 = vpop.f32.mrb[0].mxu0
      %v1213 = vadd.f32 %v1162, %v1212
      %v1214 = vpop.f32.mrb[0].mxu0
      %v1215 = vpop.f32.mrb[0].mxu0
      %v1216 = vadd.f32 %v1162, %v1215
      %v1217 = vpop.f32.mrb[0].mxu0
      %1218 = vdwg.mxu0
      %v1219 = vmul.f32 %v1213, 0.5
      %v1220 = vmul.f32 %v1216, 0.5
      %v1221 = vmul.f32 %v1213, 0.044715
      %v1222 = vmul.f32 %v1216, 0.044715
      %v1223 = vmul.f32 %v1221, %v1213
      %v1224 = vmul.f32 %v1222, %v1216
      %v1225 = vmul.f32 %v1223, %v1213
      %v1226 = vmul.f32 %v1224, %v1216
      %v1227 = vadd.f32 %v1213, %v1225
      %v1228 = vadd.f32 %v1216, %v1226
      %v1229 = vmul.f32 %v1227, 0.7978846
      %v1230 = vmul.f32 %v1228, 0.7978846
      %v1231 = vtanh.pop %v1229
      %v1232 = vtanh.pop %v1230
      %v1233 = vadd.f32 %v1231, 1.0
      %v1234 = vadd.f32 %v1232, 1.0
      %v1235 = vmul.f32 %v1219, %v1233
      %v1236 = vmul.f32 %v1220, %v1234
      %v1237 = vpack.c.bf16 %v1236, %v1235
      %v1238 = vld [vmem:[%s426] sm:$0xf]
      %v1239 = vld [vmem:[%s426 + $0x4] sm:$0xf]
      %v1240 = vld [vmem:[%s426 + $0x8] sm:$0xf]
      %v1241 = vld [vmem:[%s426 + $0xc] sm:$0xf]
      %v1242 = vld [vmem:[%s426 + $0x10] sm:$0xf]
      %v1243 = vld [vmem:[%s426 + $0x14] sm:$0xf]
      %v1244 = vld [vmem:[%s426 + $0x18] sm:$0xf]
      %v1245 = vld [vmem:[%s426 + $0x1c] sm:$0xf]
      %v1246 = vlaneseq
      %v1247 = vshrl.u32 %v1246, 7
      %v1248 = vsub.s32 5, %v1247
      %v1249 = vrot.slane %v442, %v1248
      %v1258 = vunpack.c.l.b16 %v1238
      %v1259 = vunpack.c.l.b16 %v1239
      %v1260 = vunpack.c.l.b16 %v1240
      %v1261 = vunpack.c.l.b16 %v1241
      %v1262 = vunpack.c.l.b16 %v1242
      %v1263 = vunpack.c.l.b16 %v1243
      %v1264 = vunpack.c.l.b16 %v1244
      %v1265 = vunpack.c.l.b16 %v1245
      %v1266 = vpack.c.b16 %v1259, %v1258
      %v1267 = vpack.c.b16 %v1261, %v1260
      %v1268 = vpack.c.b16 %v1263, %v1262
      %v1269 = vpack.c.b16 %v1265, %v1264
      %vm1274 = vcmask 523264
      %v1276 = vsel %vm1274, %v1237, 0
      %1278 = vmatprep.subr.bf16.mxu0 0
      %1279 = vmatpush1.bf16.msra.mxu0 %v1266
      %1280 = vmatprep.subr.bf16.mxu0 0
      %1281 = vmatpush1.bf16.msra.mxu0 %v1267
      %1282 = vmatprep.subr.bf16.mxu0 0
      %1283 = vmatpush1.bf16.msra.mxu0 %v1268
      %1284 = vmatprep.subr.bf16.mxu0 0
      %1285 = vmatpush1.bf16.msra.mxu0 %v1269
      %1286 = vmatprep.subr.bf16.mxu0 0
      %1287 = vmatpush1.bf16.msra.mxu0 0
      %1288 = vmatprep.subr.bf16.mxu0 0
      %1289 = vmatpush1.bf16.msra.mxu0 0
      %1290 = vmatprep.subr.bf16.mxu0 0
      %1291 = vmatpush1.bf16.msra.mxu0 0
      %1292 = vmatprep.subr.bf16.mxu0 0
      %1293 = vmatpush1.bf16.msra.mxu0 0
      %1294 = vmatprep.subr.bf16.mxu0 0
      %1295 = vmatpush1.bf16.msra.mxu0 0
      %1296 = vmatprep.subr.bf16.mxu0 0
      %1297 = vmatpush1.bf16.msra.mxu0 0
      %1298 = vmatprep.subr.bf16.mxu0 0
      %1299 = vmatpush1.bf16.msra.mxu0 0
      %1300 = vmatprep.subr.bf16.mxu0 0
      %1301 = vmatpush1.bf16.msra.mxu0 0
      %1302 = vmatprep.subr.bf16.mxu0 0
      %1303 = vmatpush1.bf16.msra.mxu0 0
      %1304 = vmatprep.subr.bf16.mxu0 0
      %1305 = vmatpush1.bf16.msra.mxu0 0
      %1306 = vmatprep.subr.bf16.mxu0 0
      %1307 = vmatpush1.bf16.msra.mxu0 0
      %1308 = vmatprep.subr.bf16.mxu0 0
      %1309 = vmatpush1.bf16.msra.mxu0 0
      %1310 = vmatprep.mubr.bf16.mxu0 0
      %1311 = vmatmul.mubr.bf16.gmra.mrb[0].mxu0 %v1276
      %v1312 = vpop.f32.mrb[0].mxu0
      %v1313 = vadd.f32 %v1249, %v1312
      %v1314 = vpop.f32.mrb[0].mxu0
      %v1315 = vpop.f32.mrb[0].mxu0
      %v1316 = vadd.f32 %v1249, %v1315
      %v1317 = vpop.f32.mrb[0].mxu0
      %1318 = vdwg.mxu0
      %v1319 = vadd.f32 %v1152, %v1313
      %v1320 = vadd.f32 %v1153, %v1316
      %v1321 = vsel %vm447, %v1319, 0.0
      %1322 = vadd.xlane.f32.xlu0 %v1321
      %v1323 = vpop.xlane.xlu0 %1322
      %v1324 = vsel %vm447, %v1320, 0.0
      %1325 = vadd.xlane.f32.xlu0 %v1324
      %v1326 = vpop.xlane.xlu0 %1325
      %v1327 = vmul.f32 %v1323, %v454
      %v1328 = vmul.f32 %v1326, %v454
      %v1329 = vsub.f32 %v1319, %v1327
      %v1330 = vsub.f32 %v1320, %v1328
      %v1331 = vmul.f32 %v1329, %v1329
      %v1332 = vmul.f32 %v1330, %v1330
      %v1333 = vsel %vm447, %v1331, 0.0
      %1334 = vadd.xlane.f32.xlu0 %v1333
      %v1335 = vpop.xlane.xlu0 %1334
      %v1336 = vsel %vm447, %v1332, 0.0
      %1337 = vadd.xlane.f32.xlu0 %v1336
      %v1338 = vpop.xlane.xlu0 %1337
      %v1339 = vmul.f32 %v1335, %v454
      %v1340 = vmul.f32 %v1338, %v454
      %v1341 = vadd.f32 %v1339, 1e-12
      %v1342 = vadd.f32 %v1340, 1e-12
      %v1343 = vrsqrt.pop %v1341
      %v1344 = vrsqrt.pop %v1342
      %v1345 = vmul.f32 %v1329, %v1343
      %v1346 = vmul.f32 %v1330, %v1344
      %v1347 = vlaneseq
      %v1348 = vshrl.u32 %v1347, 7
      %v1349 = vsub.s32 6, %v1348
      %v1350 = vrot.slane %v442, %v1349
      %v1351 = vmul.f32 %v1345, %v1350
      %v1352 = vmul.f32 %v1346, %v1350
      %v1353 = vlaneseq
      %v1354 = vshrl.u32 %v1353, 7
      %v1355 = vsub.s32 7, %v1354
      %v1356 = vrot.slane %v442, %v1355
      %v1357 = vadd.f32 %v1351, %v1356
      %v1358 = vadd.f32 %v1352, %v1356
      %v1359 = vpack.c.bf16 %v1358, %v1357
      %s1360 = scalar_lea.vmem %s411, 16
      %v1361 = vld [vmem:[%s1360] sm:$0xf]
      %v1362 = vld [vmem:[%s1360 + $0x4] sm:$0xf]
      %v1363 = vld [vmem:[%s1360 + $0x8] sm:$0xf]
      %v1364 = vld [vmem:[%s1360 + $0xc] sm:$0xf]
      %v1365 = vlaneseq
      %v1366 = vshrl.u32 %v1365, 7
      %v1367 = vsub.s32 0, %v1366
      %v1368 = vrot.slane %v443, %v1367
      %v1373 = vunpack.c.l.b16 %v1361
      %v1374 = vunpack.c.l.b16 %v1362
      %v1375 = vunpack.c.l.b16 %v1363
      %v1376 = vunpack.c.l.b16 %v1364
      %v1377 = vpack.c.b16 %v1374, %v1373
      %v1378 = vpack.c.b16 %v1376, %v1375
      %v1382 = vsel %vm447, %v1359, 0
      %1384 = vmatprep.subr.bf16.mxu0 0
      %1385 = vmatpush1.bf16.msra.mxu0 %v1377
      %1386 = vmatprep.subr.bf16.mxu0 0
      %1387 = vmatpush1.bf16.msra.mxu0 %v1378
      %1388 = vmatprep.subr.bf16.mxu0 0
      %1389 = vmatpush1.bf16.msra.mxu0 0
      %1390 = vmatprep.subr.bf16.mxu0 0
      %1391 = vmatpush1.bf16.msra.mxu0 0
      %1392 = vmatprep.subr.bf16.mxu0 0
      %1393 = vmatpush1.bf16.msra.mxu0 0
      %1394 = vmatprep.subr.bf16.mxu0 0
      %1395 = vmatpush1.bf16.msra.mxu0 0
      %1396 = vmatprep.subr.bf16.mxu0 0
      %1397 = vmatpush1.bf16.msra.mxu0 0
      %1398 = vmatprep.subr.bf16.mxu0 0
      %1399 = vmatpush1.bf16.msra.mxu0 0
      %1400 = vmatprep.subr.bf16.mxu0 0
      %1401 = vmatpush1.bf16.msra.mxu0 0
      %1402 = vmatprep.subr.bf16.mxu0 0
      %1403 = vmatpush1.bf16.msra.mxu0 0
      %1404 = vmatprep.subr.bf16.mxu0 0
      %1405 = vmatpush1.bf16.msra.mxu0 0
      %1406 = vmatprep.subr.bf16.mxu0 0
      %1407 = vmatpush1.bf16.msra.mxu0 0
      %1408 = vmatprep.subr.bf16.mxu0 0
      %1409 = vmatpush1.bf16.msra.mxu0 0
      %1410 = vmatprep.subr.bf16.mxu0 0
      %1411 = vmatpush1.bf16.msra.mxu0 0
      %1412 = vmatprep.subr.bf16.mxu0 0
      %1413 = vmatpush1.bf16.msra.mxu0 0
      %1414 = vmatprep.subr.bf16.mxu0 0
      %1415 = vmatpush1.bf16.msra.mxu0 0
      %1416 = vmatprep.mubr.bf16.mxu0 0
      %1417 = vmatmul.mubr.bf16.gmra.mrb[0].mxu0 %v1382
      %v1418 = vpop.f32.mrb[0].mxu0
      %v1419 = vadd.f32 %v1368, %v1418
      %v1420 = vpop.f32.mrb[0].mxu0
      %v1421 = vpop.f32.mrb[0].mxu0
      %v1422 = vadd.f32 %v1368, %v1421
      %v1423 = vpop.f32.mrb[0].mxu0
      %1424 = vdwg.mxu0
      %v1425 = vpack.c.bf16 %v1422, %v1419
      %v1427 = vunpack.c.l.b16 %v1425
      %v1428 = vunpack.c.h.b16 %v1425
      %v1429 = vpack.c.b16 %v1427, %v1427
      %v1430 = vpack.c.b16 %v1428, %v1428
      %1431 = vrot.lane.b32.xlu0 %v1429, 96
      %v1432 = vpop.permute.xlu0 %1431
      %v1434 = vsel %vm597, %v1429, 0
      %v1437 = vsel %vm597, %v1432, 0
      %1439 = vmatprep.subr.bf16.mxu0 0
      %1440 = vmatpush1.bf16.xpose.msra.mxu0 %v1437
      %1441 = vmatprep.subr.bf16.mxu0 0
      %1442 = vmatpush1.bf16.xpose.msra.mxu0 0
      %1443 = vmatprep.subr.bf16.mxu0 0
      %1444 = vmatpush1.bf16.xpose.msra.mxu0 0
      %1445 = vmatprep.subr.bf16.mxu0 0
      %1446 = vmatpush1.bf16.xpose.msra.mxu0 0
      %1447 = vmatprep.subr.bf16.mxu0 0
      %1448 = vmatpush1.bf16.xpose.msra.mxu0 0
      %1449 = vmatprep.subr.bf16.mxu0 0
      %1450 = vmatpush1.bf16.xpose.msra.mxu0 0
      %1451 = vmatprep.subr.bf16.mxu0 0
      %1452 = vmatpush1.bf16.xpose.msra.mxu0 0
      %1453 = vmatprep.subr.bf16.mxu0 0
      %1454 = vmatpush1.bf16.xpose.msra.mxu0 0
      %1455 = vmatprep.subr.bf16.mxu0 0
      %1456 = vmatpush1.bf16.xpose.msra.mxu0 0
      %1457 = vmatprep.subr.bf16.mxu0 0
      %1458 = vmatpush1.bf16.xpose.msra.mxu0 0
      %1459 = vmatprep.subr.bf16.mxu0 0
      %1460 = vmatpush1.bf16.xpose.msra.mxu0 0
      %1461 = vmatprep.subr.bf16.mxu0 0
      %1462 = vmatpush1.bf16.xpose.msra.mxu0 0
      %1463 = vmatprep.subr.bf16.mxu0 0
      %1464 = vmatpush1.bf16.xpose.msra.mxu0 0
      %1465 = vmatprep.subr.bf16.mxu0 0
      %1466 = vmatpush1.bf16.xpose.msra.mxu0 0
      %1467 = vmatprep.subr.bf16.mxu0 0
      %1468 = vmatpush1.bf16.xpose.msra.mxu0 0
      %1469 = vmatprep.subr.bf16.mxu0 0
      %1470 = vmatpush1.bf16.xpose.msra.mxu0 0
      %1471 = vmatprep.mubr.bf16.mxu0 0
      %1472 = vmatmul.mubr.bf16.gmra.mrb[0].mxu0 %v1434
      %v1473 = vpop.f32.mrb[0].mxu0
      %v1474 = vadd.f32 %v588, %v1473
      %v1475 = vpop.f32.mrb[0].mxu0
      %v1476 = vpop.f32.mrb[0].mxu0
      %v1477 = vpop.f32.mrb[0].mxu0
      %1478 = vdwg.mxu0
      %1479 = vrot.lane.b32.xlu0 %v1430, 96
      %v1480 = vpop.permute.xlu0 %1479
      %v1482 = vsel %vm597, %v1430, 0
      %v1485 = vsel %vm597, %v1480, 0
      %1487 = vmatprep.subr.bf16.mxu0 0
      %1488 = vmatpush1.bf16.xpose.msra.mxu0 %v1485
      %1489 = vmatprep.subr.bf16.mxu0 0
      %1490 = vmatpush1.bf16.xpose.msra.mxu0 0
      %1491 = vmatprep.subr.bf16.mxu0 0
      %1492 = vmatpush1.bf16.xpose.msra.mxu0 0
      %1493 = vmatprep.subr.bf16.mxu0 0
      %1494 = vmatpush1.bf16.xpose.msra.mxu0 0
      %1495 = vmatprep.subr.bf16.mxu0 0
      %1496 = vmatpush1.bf16.xpose.msra.mxu0 0
      %1497 = vmatprep.subr.bf16.mxu0 0
      %1498 = vmatpush1.bf16.xpose.msra.mxu0 0
      %1499 = vmatprep.subr.bf16.mxu0 0
      %1500 = vmatpush1.bf16.xpose.msra.mxu0 0
      %1501 = vmatprep.subr.bf16.mxu0 0
      %1502 = vmatpush1.bf16.xpose.msra.mxu0 0
      %1503 = vmatprep.subr.bf16.mxu0 0
      %1504 = vmatpush1.bf16.xpose.msra.mxu0 0
      %1505 = vmatprep.subr.bf16.mxu0 0
      %1506 = vmatpush1.bf16.xpose.msra.mxu0 0
      %1507 = vmatprep.subr.bf16.mxu0 0
      %1508 = vmatpush1.bf16.xpose.msra.mxu0 0
      %1509 = vmatprep.subr.bf16.mxu0 0
      %1510 = vmatpush1.bf16.xpose.msra.mxu0 0
      %1511 = vmatprep.subr.bf16.mxu0 0
      %1512 = vmatpush1.bf16.xpose.msra.mxu0 0
      %1513 = vmatprep.subr.bf16.mxu0 0
      %1514 = vmatpush1.bf16.xpose.msra.mxu0 0
      %1515 = vmatprep.subr.bf16.mxu0 0
      %1516 = vmatpush1.bf16.xpose.msra.mxu0 0
      %1517 = vmatprep.subr.bf16.mxu0 0
      %1518 = vmatpush1.bf16.xpose.msra.mxu0 0
      %1519 = vmatprep.mubr.bf16.mxu0 0
      %1520 = vmatmul.mubr.bf16.gmra.mrb[0].mxu0 %v1482
      %v1521 = vpop.f32.mrb[0].mxu0
      %v1522 = vadd.f32 %v592, %v1521
      %v1523 = vpop.f32.mrb[0].mxu0
      %v1524 = vpop.f32.mrb[0].mxu0
      %v1525 = vpop.f32.mrb[0].mxu0
      %1526 = vdwg.mxu0
      %v1527 = vsel %vm692, %v1474, -inf
      %1528 = vmax.xlane.f32.xlu0 %v1527
      %v1529 = vpop.xlane.xlu0 %1528
      %v1530 = vsel %vm692, %v1522, -inf
      %1531 = vmax.xlane.f32.xlu0 %v1530
      %v1532 = vpop.xlane.xlu0 %1531
      %v1533 = vsub.f32 %v1474, %v1529
      %v1534 = vsub.f32 %v1522, %v1532
      %v1535 = vmul.f32 %v1533, 1.442695
      %v1536 = vpow.pop %v1535
      %v1537 = vmul.f32 %v1534, 1.442695
      %v1538 = vpow.pop %v1537
      %v1539 = vsel %vm692, %v1536, 0.0
      %1540 = vadd.xlane.f32.xlu0 %v1539
      %v1541 = vpop.xlane.xlu0 %1540
      %v1542 = vsel %vm692, %v1538, 0.0
      %1543 = vadd.xlane.f32.xlu0 %v1542
      %v1544 = vpop.xlane.xlu0 %1543
      %v1545 = vrcp.pop %v1541
      %v1546 = vrcp.pop %v1544
      %v1547 = vmul.f32 %v1536, %v1545
      %v1548 = vmul.f32 %v1538, %v1546
      %v1549 = vpack.c.bf16 %v1547, %v1547
      %v1550 = vpack.c.bf16 %v1548, %v1548
      %1551 = vrot.lane.b32.xlu0 %v1429, 64
      %v1552 = vpop.permute.xlu0 %1551
      %v1554 = vsel %vm692, %v1549, 0
      %v1557 = vsel %vm722, %v1552, 0
      %1559 = vmatprep.subr.bf16.mxu0 0
      %1560 = vmatpush1.bf16.msra.mxu0 %v1557
      %1561 = vmatprep.subr.bf16.mxu0 0
      %1562 = vmatpush1.bf16.msra.mxu0 0
      %1563 = vmatprep.subr.bf16.mxu0 0
      %1564 = vmatpush1.bf16.msra.mxu0 0
      %1565 = vmatprep.subr.bf16.mxu0 0
      %1566 = vmatpush1.bf16.msra.mxu0 0
      %1567 = vmatprep.subr.bf16.mxu0 0
      %1568 = vmatpush1.bf16.msra.mxu0 0
      %1569 = vmatprep.subr.bf16.mxu0 0
      %1570 = vmatpush1.bf16.msra.mxu0 0
      %1571 = vmatprep.subr.bf16.mxu0 0
      %1572 = vmatpush1.bf16.msra.mxu0 0
      %1573 = vmatprep.subr.bf16.mxu0 0
      %1574 = vmatpush1.bf16.msra.mxu0 0
      %1575 = vmatprep.subr.bf16.mxu0 0
      %1576 = vmatpush1.bf16.msra.mxu0 0
      %1577 = vmatprep.subr.bf16.mxu0 0
      %1578 = vmatpush1.bf16.msra.mxu0 0
      %1579 = vmatprep.subr.bf16.mxu0 0
      %1580 = vmatpush1.bf16.msra.mxu0 0
      %1581 = vmatprep.subr.bf16.mxu0 0
      %1582 = vmatpush1.bf16.msra.mxu0 0
      %1583 = vmatprep.subr.bf16.mxu0 0
      %1584 = vmatpush1.bf16.msra.mxu0 0
      %1585 = vmatprep.subr.bf16.mxu0 0
      %1586 = vmatpush1.bf16.msra.mxu0 0
      %1587 = vmatprep.subr.bf16.mxu0 0
      %1588 = vmatpush1.bf16.msra.mxu0 0
      %1589 = vmatprep.subr.bf16.mxu0 0
      %1590 = vmatpush1.bf16.msra.mxu0 0
      %1591 = vmatprep.mubr.bf16.mxu0 0
      %1592 = vmatmul.mubr.bf16.gmra.mrb[0].mxu0 %v1554
      %v1593 = vpop.f32.mrb[0].mxu0
      %v1594 = vadd.f32 0.0, %v1593
      %v1595 = vpop.f32.mrb[0].mxu0
      %v1596 = vpop.f32.mrb[0].mxu0
      %v1597 = vpop.f32.mrb[0].mxu0
      %1598 = vdwg.mxu0
      %1599 = vrot.lane.b32.xlu0 %v1430, 64
      %v1600 = vpop.permute.xlu0 %1599
      %v1602 = vsel %vm692, %v1550, 0
      %v1605 = vsel %vm722, %v1600, 0
      %1607 = vmatprep.subr.bf16.mxu0 0
      %1608 = vmatpush1.bf16.msra.mxu0 %v1605
      %1609 = vmatprep.subr.bf16.mxu0 0
      %1610 = vmatpush1.bf16.msra.mxu0 0
      %1611 = vmatprep.subr.bf16.mxu0 0
      %1612 = vmatpush1.bf16.msra.mxu0 0
      %1613 = vmatprep.subr.bf16.mxu0 0
      %1614 = vmatpush1.bf16.msra.mxu0 0
      %1615 = vmatprep.subr.bf16.mxu0 0
      %1616 = vmatpush1.bf16.msra.mxu0 0
      %1617 = vmatprep.subr.bf16.mxu0 0
      %1618 = vmatpush1.bf16.msra.mxu0 0
      %1619 = vmatprep.subr.bf16.mxu0 0
      %1620 = vmatpush1.bf16.msra.mxu0 0
      %1621 = vmatprep.subr.bf16.mxu0 0
      %1622 = vmatpush1.bf16.msra.mxu0 0
      %1623 = vmatprep.subr.bf16.mxu0 0
      %1624 = vmatpush1.bf16.msra.mxu0 0
      %1625 = vmatprep.subr.bf16.mxu0 0
      %1626 = vmatpush1.bf16.msra.mxu0 0
      %1627 = vmatprep.subr.bf16.mxu0 0
      %1628 = vmatpush1.bf16.msra.mxu0 0
      %1629 = vmatprep.subr.bf16.mxu0 0
      %1630 = vmatpush1.bf16.msra.mxu0 0
      %1631 = vmatprep.subr.bf16.mxu0 0
      %1632 = vmatpush1.bf16.msra.mxu0 0
      %1633 = vmatprep.subr.bf16.mxu0 0
      %1634 = vmatpush1.bf16.msra.mxu0 0
      %1635 = vmatprep.subr.bf16.mxu0 0
      %1636 = vmatpush1.bf16.msra.mxu0 0
      %1637 = vmatprep.subr.bf16.mxu0 0
      %1638 = vmatpush1.bf16.msra.mxu0 0
      %1639 = vmatprep.mubr.bf16.mxu0 0
      %1640 = vmatmul.mubr.bf16.gmra.mrb[0].mxu0 %v1602
      %v1641 = vpop.f32.mrb[0].mxu0
      %v1642 = vadd.f32 0.0, %v1641
      %v1643 = vpop.f32.mrb[0].mxu0
      %v1644 = vpop.f32.mrb[0].mxu0
      %v1645 = vpop.f32.mrb[0].mxu0
      %1646 = vdwg.mxu0
      %1647 = vst.msk [vmem:[#allocation2] sm:$0xff] %vm597, %v1594
      %1648 = vst.msk [vmem:[#allocation2 + $0x8] sm:$0xff] %vm597, %v1642
      %1649 = vrot.lane.b32.xlu0 %v1429, 112
      %v1650 = vpop.permute.xlu0 %1649
      %1651 = vrot.lane.b32.xlu0 %v1429, 80
      %v1652 = vpop.permute.xlu0 %1651
      %v1654 = vsel %vm597, %v1650, 0
      %v1657 = vsel %vm597, %v1652, 0
      %1659 = vmatprep.subr.bf16.mxu0 0
      %1660 = vmatpush1.bf16.xpose.msra.mxu0 %v1657
      %1661 = vmatprep.subr.bf16.mxu0 0
      %1662 = vmatpush1.bf16.xpose.msra.mxu0 0
      %1663 = vmatprep.subr.bf16.mxu0 0
      %1664 = vmatpush1.bf16.xpose.msra.mxu0 0
      %1665 = vmatprep.subr.bf16.mxu0 0
      %1666 = vmatpush1.bf16.xpose.msra.mxu0 0
      %1667 = vmatprep.subr.bf16.mxu0 0
      %1668 = vmatpush1.bf16.xpose.msra.mxu0 0
      %1669 = vmatprep.subr.bf16.mxu0 0
      %1670 = vmatpush1.bf16.xpose.msra.mxu0 0
      %1671 = vmatprep.subr.bf16.mxu0 0
      %1672 = vmatpush1.bf16.xpose.msra.mxu0 0
      %1673 = vmatprep.subr.bf16.mxu0 0
      %1674 = vmatpush1.bf16.xpose.msra.mxu0 0
      %1675 = vmatprep.subr.bf16.mxu0 0
      %1676 = vmatpush1.bf16.xpose.msra.mxu0 0
      %1677 = vmatprep.subr.bf16.mxu0 0
      %1678 = vmatpush1.bf16.xpose.msra.mxu0 0
      %1679 = vmatprep.subr.bf16.mxu0 0
      %1680 = vmatpush1.bf16.xpose.msra.mxu0 0
      %1681 = vmatprep.subr.bf16.mxu0 0
      %1682 = vmatpush1.bf16.xpose.msra.mxu0 0
      %1683 = vmatprep.subr.bf16.mxu0 0
      %1684 = vmatpush1.bf16.xpose.msra.mxu0 0
      %1685 = vmatprep.subr.bf16.mxu0 0
      %1686 = vmatpush1.bf16.xpose.msra.mxu0 0
      %1687 = vmatprep.subr.bf16.mxu0 0
      %1688 = vmatpush1.bf16.xpose.msra.mxu0 0
      %1689 = vmatprep.subr.bf16.mxu0 0
      %1690 = vmatpush1.bf16.xpose.msra.mxu0 0
      %1691 = vmatprep.mubr.bf16.mxu0 0
      %1692 = vmatmul.mubr.bf16.gmra.mrb[0].mxu0 %v1654
      %v1693 = vpop.f32.mrb[0].mxu0
      %v1694 = vadd.f32 %v588, %v1693
      %v1695 = vpop.f32.mrb[0].mxu0
      %v1696 = vpop.f32.mrb[0].mxu0
      %v1697 = vpop.f32.mrb[0].mxu0
      %1698 = vdwg.mxu0
      %1699 = vrot.lane.b32.xlu0 %v1430, 112
      %v1700 = vpop.permute.xlu0 %1699
      %1701 = vrot.lane.b32.xlu0 %v1430, 80
      %v1702 = vpop.permute.xlu0 %1701
      %v1704 = vsel %vm597, %v1700, 0
      %v1707 = vsel %vm597, %v1702, 0
      %1709 = vmatprep.subr.bf16.mxu0 0
      %1710 = vmatpush1.bf16.xpose.msra.mxu0 %v1707
      %1711 = vmatprep.subr.bf16.mxu0 0
      %1712 = vmatpush1.bf16.xpose.msra.mxu0 0
      %1713 = vmatprep.subr.bf16.mxu0 0
      %1714 = vmatpush1.bf16.xpose.msra.mxu0 0
      %1715 = vmatprep.subr.bf16.mxu0 0
      %1716 = vmatpush1.bf16.xpose.msra.mxu0 0
      %1717 = vmatprep.subr.bf16.mxu0 0
      %1718 = vmatpush1.bf16.xpose.msra.mxu0 0
      %1719 = vmatprep.subr.bf16.mxu0 0
      %1720 = vmatpush1.bf16.xpose.msra.mxu0 0
      %1721 = vmatprep.subr.bf16.mxu0 0
      %1722 = vmatpush1.bf16.xpose.msra.mxu0 0
      %1723 = vmatprep.subr.bf16.mxu0 0
      %1724 = vmatpush1.bf16.xpose.msra.mxu0 0
      %1725 = vmatprep.subr.bf16.mxu0 0
      %1726 = vmatpush1.bf16.xpose.msra.mxu0 0
      %1727 = vmatprep.subr.bf16.mxu0 0
      %1728 = vmatpush1.bf16.xpose.msra.mxu0 0
      %1729 = vmatprep.subr.bf16.mxu0 0
      %1730 = vmatpush1.bf16.xpose.msra.mxu0 0
      %1731 = vmatprep.subr.bf16.mxu0 0
      %1732 = vmatpush1.bf16.xpose.msra.mxu0 0
      %1733 = vmatprep.subr.bf16.mxu0 0
      %1734 = vmatpush1.bf16.xpose.msra.mxu0 0
      %1735 = vmatprep.subr.bf16.mxu0 0
      %1736 = vmatpush1.bf16.xpose.msra.mxu0 0
      %1737 = vmatprep.subr.bf16.mxu0 0
      %1738 = vmatpush1.bf16.xpose.msra.mxu0 0
      %1739 = vmatprep.subr.bf16.mxu0 0
      %1740 = vmatpush1.bf16.xpose.msra.mxu0 0
      %1741 = vmatprep.mubr.bf16.mxu0 0
      %1742 = vmatmul.mubr.bf16.gmra.mrb[0].mxu0 %v1704
      %v1743 = vpop.f32.mrb[0].mxu0
      %v1744 = vadd.f32 %v592, %v1743
      %v1745 = vpop.f32.mrb[0].mxu0
      %v1746 = vpop.f32.mrb[0].mxu0
      %v1747 = vpop.f32.mrb[0].mxu0
      %1748 = vdwg.mxu0
      %v1749 = vsel %vm692, %v1694, -inf
      %1750 = vmax.xlane.f32.xlu0 %v1749
      %v1751 = vpop.xlane.xlu0 %1750
      %v1752 = vsel %vm692, %v1744, -inf
      %1753 = vmax.xlane.f32.xlu0 %v1752
      %v1754 = vpop.xlane.xlu0 %1753
      %v1755 = vsub.f32 %v1694, %v1751
      %v1756 = vsub.f32 %v1744, %v1754
      %v1757 = vmul.f32 %v1755, 1.442695
      %v1758 = vpow.pop %v1757
      %v1759 = vmul.f32 %v1756, 1.442695
      %v1760 = vpow.pop %v1759
      %v1761 = vsel %vm692, %v1758, 0.0
      %1762 = vadd.xlane.f32.xlu0 %v1761
      %v1763 = vpop.xlane.xlu0 %1762
      %v1764 = vsel %vm692, %v1760, 0.0
      %1765 = vadd.xlane.f32.xlu0 %v1764
      %v1766 = vpop.xlane.xlu0 %1765
      %v1767 = vrcp.pop %v1763
      %v1768 = vrcp.pop %v1766
      %v1769 = vmul.f32 %v1758, %v1767
      %v1770 = vmul.f32 %v1760, %v1768
      %v1771 = vpack.c.bf16 %v1769, %v1769
      %v1772 = vpack.c.bf16 %v1770, %v1770
      %1773 = vrot.lane.b32.xlu0 %v1429, 48
      %v1774 = vpop.permute.xlu0 %1773
      %v1776 = vsel %vm692, %v1771, 0
      %v1779 = vsel %vm722, %v1774, 0
      %1781 = vmatprep.subr.bf16.mxu0 0
      %1782 = vmatpush1.bf16.msra.mxu0 %v1779
      %1783 = vmatprep.subr.bf16.mxu0 0
      %1784 = vmatpush1.bf16.msra.mxu0 0
      %1785 = vmatprep.subr.bf16.mxu0 0
      %1786 = vmatpush1.bf16.msra.mxu0 0
      %1787 = vmatprep.subr.bf16.mxu0 0
      %1788 = vmatpush1.bf16.msra.mxu0 0
      %1789 = vmatprep.subr.bf16.mxu0 0
      %1790 = vmatpush1.bf16.msra.mxu0 0
      %1791 = vmatprep.subr.bf16.mxu0 0
      %1792 = vmatpush1.bf16.msra.mxu0 0
      %1793 = vmatprep.subr.bf16.mxu0 0
      %1794 = vmatpush1.bf16.msra.mxu0 0
      %1795 = vmatprep.subr.bf16.mxu0 0
      %1796 = vmatpush1.bf16.msra.mxu0 0
      %1797 = vmatprep.subr.bf16.mxu0 0
      %1798 = vmatpush1.bf16.msra.mxu0 0
      %1799 = vmatprep.subr.bf16.mxu0 0
      %1800 = vmatpush1.bf16.msra.mxu0 0
      %1801 = vmatprep.subr.bf16.mxu0 0
      %1802 = vmatpush1.bf16.msra.mxu0 0
      %1803 = vmatprep.subr.bf16.mxu0 0
      %1804 = vmatpush1.bf16.msra.mxu0 0
      %1805 = vmatprep.subr.bf16.mxu0 0
      %1806 = vmatpush1.bf16.msra.mxu0 0
      %1807 = vmatprep.subr.bf16.mxu0 0
      %1808 = vmatpush1.bf16.msra.mxu0 0
      %1809 = vmatprep.subr.bf16.mxu0 0
      %1810 = vmatpush1.bf16.msra.mxu0 0
      %1811 = vmatprep.subr.bf16.mxu0 0
      %1812 = vmatpush1.bf16.msra.mxu0 0
      %1813 = vmatprep.mubr.bf16.mxu0 0
      %1814 = vmatmul.mubr.bf16.gmra.mrb[0].mxu0 %v1776
      %v1815 = vpop.f32.mrb[0].mxu0
      %v1816 = vadd.f32 0.0, %v1815
      %v1817 = vpop.f32.mrb[0].mxu0
      %v1818 = vpop.f32.mrb[0].mxu0
      %v1819 = vpop.f32.mrb[0].mxu0
      %1820 = vdwg.mxu0
      %1821 = vrot.lane.b32.xlu0 %v1430, 48
      %v1822 = vpop.permute.xlu0 %1821
      %v1824 = vsel %vm692, %v1772, 0
      %v1827 = vsel %vm722, %v1822, 0
      %1829 = vmatprep.subr.bf16.mxu0 0
      %1830 = vmatpush1.bf16.msra.mxu0 %v1827
      %1831 = vmatprep.subr.bf16.mxu0 0
      %1832 = vmatpush1.bf16.msra.mxu0 0
      %1833 = vmatprep.subr.bf16.mxu0 0
      %1834 = vmatpush1.bf16.msra.mxu0 0
      %1835 = vmatprep.subr.bf16.mxu0 0
      %1836 = vmatpush1.bf16.msra.mxu0 0
      %1837 = vmatprep.subr.bf16.mxu0 0
      %1838 = vmatpush1.bf16.msra.mxu0 0
      %1839 = vmatprep.subr.bf16.mxu0 0
      %1840 = vmatpush1.bf16.msra.mxu0 0
      %1841 = vmatprep.subr.bf16.mxu0 0
      %1842 = vmatpush1.bf16.msra.mxu0 0
      %1843 = vmatprep.subr.bf16.mxu0 0
      %1844 = vmatpush1.bf16.msra.mxu0 0
      %1845 = vmatprep.subr.bf16.mxu0 0
      %1846 = vmatpush1.bf16.msra.mxu0 0
      %1847 = vmatprep.subr.bf16.mxu0 0
      %1848 = vmatpush1.bf16.msra.mxu0 0
      %1849 = vmatprep.subr.bf16.mxu0 0
      %1850 = vmatpush1.bf16.msra.mxu0 0
      %1851 = vmatprep.subr.bf16.mxu0 0
      %1852 = vmatpush1.bf16.msra.mxu0 0
      %1853 = vmatprep.subr.bf16.mxu0 0
      %1854 = vmatpush1.bf16.msra.mxu0 0
      %1855 = vmatprep.subr.bf16.mxu0 0
      %1856 = vmatpush1.bf16.msra.mxu0 0
      %1857 = vmatprep.subr.bf16.mxu0 0
      %1858 = vmatpush1.bf16.msra.mxu0 0
      %1859 = vmatprep.subr.bf16.mxu0 0
      %1860 = vmatpush1.bf16.msra.mxu0 0
      %1861 = vmatprep.mubr.bf16.mxu0 0
      %1862 = vmatmul.mubr.bf16.gmra.mrb[0].mxu0 %v1824
      %v1863 = vpop.f32.mrb[0].mxu0
      %v1864 = vadd.f32 0.0, %v1863
      %v1865 = vpop.f32.mrb[0].mxu0
      %v1866 = vpop.f32.mrb[0].mxu0
      %v1867 = vpop.f32.mrb[0].mxu0
      %1868 = vdwg.mxu0
      %1871 = vrot.lane.b32.xlu0 %v1816, 16
      %v1872 = vpop.permute.xlu0 %1871
      %1873 = vrot.lane.b32.xlu0 %v1864, 16
      %v1874 = vpop.permute.xlu0 %1873
      %1877 = vst.msk [vmem:[#allocation2] sm:$0xff] %vm1044, %v1872
      %1878 = vst.msk [vmem:[#allocation2 + $0x8] sm:$0xff] %vm1044, %v1874
      %v1879 = vld [vmem:[#allocation2] sm:$0xff]
      %v1880 = vld [vmem:[#allocation2 + $0x8] sm:$0xff]
      %v1881 = vpack.c.bf16 %v1880, %v1879
      %s1882 = scalar_lea.vmem %s416, 16
      %v1883 = vld [vmem:[%s1882] sm:$0xf]
      %v1884 = vld [vmem:[%s1882 + $0x4] sm:$0xf]
      %v1885 = vld [vmem:[%s1882 + $0x8] sm:$0xf]
      %v1886 = vld [vmem:[%s1882 + $0xc] sm:$0xf]
      %v1887 = vlaneseq
      %v1888 = vshrl.u32 %v1887, 7
      %v1889 = vsub.s32 1, %v1888
      %v1890 = vrot.slane %v443, %v1889
      %v1895 = vunpack.c.l.b16 %v1883
      %v1896 = vunpack.c.l.b16 %v1884
      %v1897 = vunpack.c.l.b16 %v1885
      %v1898 = vunpack.c.l.b16 %v1886
      %v1899 = vpack.c.b16 %v1896, %v1895
      %v1900 = vpack.c.b16 %v1898, %v1897
      %v1904 = vsel %vm447, %v1881, 0
      %1906 = vmatprep.subr.bf16.mxu0 0
      %1907 = vmatpush1.bf16.msra.mxu0 %v1899
      %1908 = vmatprep.subr.bf16.mxu0 0
      %1909 = vmatpush1.bf16.msra.mxu0 %v1900
      %1910 = vmatprep.subr.bf16.mxu0 0
      %1911 = vmatpush1.bf16.msra.mxu0 0
      %1912 = vmatprep.subr.bf16.mxu0 0
      %1913 = vmatpush1.bf16.msra.mxu0 0
      %1914 = vmatprep.subr.bf16.mxu0 0
      %1915 = vmatpush1.bf16.msra.mxu0 0
      %1916 = vmatprep.subr.bf16.mxu0 0
      %1917 = vmatpush1.bf16.msra.mxu0 0
      %1918 = vmatprep.subr.bf16.mxu0 0
      %1919 = vmatpush1.bf16.msra.mxu0 0
      %1920 = vmatprep.subr.bf16.mxu0 0
      %1921 = vmatpush1.bf16.msra.mxu0 0
      %1922 = vmatprep.subr.bf16.mxu0 0
      %1923 = vmatpush1.bf16.msra.mxu0 0
      %1924 = vmatprep.subr.bf16.mxu0 0
      %1925 = vmatpush1.bf16.msra.mxu0 0
      %1926 = vmatprep.subr.bf16.mxu0 0
      %1927 = vmatpush1.bf16.msra.mxu0 0
      %1928 = vmatprep.subr.bf16.mxu0 0
      %1929 = vmatpush1.bf16.msra.mxu0 0
      %1930 = vmatprep.subr.bf16.mxu0 0
      %1931 = vmatpush1.bf16.msra.mxu0 0
      %1932 = vmatprep.subr.bf16.mxu0 0
      %1933 = vmatpush1.bf16.msra.mxu0 0
      %1934 = vmatprep.subr.bf16.mxu0 0
      %1935 = vmatpush1.bf16.msra.mxu0 0
      %1936 = vmatprep.subr.bf16.mxu0 0
      %1937 = vmatpush1.bf16.msra.mxu0 0
      %1938 = vmatprep.mubr.bf16.mxu0 0
      %1939 = vmatmul.mubr.bf16.gmra.mrb[0].mxu0 %v1904
      %v1940 = vpop.f32.mrb[0].mxu0
      %v1941 = vadd.f32 %v1890, %v1940
      %v1942 = vpop.f32.mrb[0].mxu0
      %v1943 = vpop.f32.mrb[0].mxu0
      %v1944 = vadd.f32 %v1890, %v1943
      %v1945 = vpop.f32.mrb[0].mxu0
      %1946 = vdwg.mxu0
      %v1947 = vadd.f32 %v1357, %v1941
      %v1948 = vadd.f32 %v1358, %v1944
      %v1949 = vsel %vm447, %v1947, 0.0
      %1950 = vadd.xlane.f32.xlu0 %v1949
      %v1951 = vpop.xlane.xlu0 %1950
      %v1952 = vsel %vm447, %v1948, 0.0
      %1953 = vadd.xlane.f32.xlu0 %v1952
      %v1954 = vpop.xlane.xlu0 %1953
      %v1955 = vmul.f32 %v1951, %v454
      %v1956 = vmul.f32 %v1954, %v454
      %v1957 = vsub.f32 %v1947, %v1955
      %v1958 = vsub.f32 %v1948, %v1956
      %v1959 = vmul.f32 %v1957, %v1957
      %v1960 = vmul.f32 %v1958, %v1958
      %v1961 = vsel %vm447, %v1959, 0.0
      %1962 = vadd.xlane.f32.xlu0 %v1961
      %v1963 = vpop.xlane.xlu0 %1962
      %v1964 = vsel %vm447, %v1960, 0.0
      %1965 = vadd.xlane.f32.xlu0 %v1964
      %v1966 = vpop.xlane.xlu0 %1965
      %v1967 = vmul.f32 %v1963, %v454
      %v1968 = vmul.f32 %v1966, %v454
      %v1969 = vadd.f32 %v1967, 1e-12
      %v1970 = vadd.f32 %v1968, 1e-12
      %v1971 = vrsqrt.pop %v1969
      %v1972 = vrsqrt.pop %v1970
      %v1973 = vmul.f32 %v1957, %v1971
      %v1974 = vmul.f32 %v1958, %v1972
      %v1975 = vlaneseq
      %v1976 = vshrl.u32 %v1975, 7
      %v1977 = vsub.s32 2, %v1976
      %v1978 = vrot.slane %v443, %v1977
      %v1979 = vmul.f32 %v1973, %v1978
      %v1980 = vmul.f32 %v1974, %v1978
      %v1981 = vlaneseq
      %v1982 = vshrl.u32 %v1981, 7
      %v1983 = vsub.s32 3, %v1982
      %v1984 = vrot.slane %v443, %v1983
      %v1985 = vadd.f32 %v1979, %v1984
      %v1986 = vadd.f32 %v1980, %v1984
      %v1987 = vpack.c.bf16 %v1986, %v1985
      %s1988 = scalar_lea.vmem %s421, 16
      %v1989 = vld [vmem:[%s1988] sm:$0xf]
      %v1990 = vld [vmem:[%s1988 + $0x4] sm:$0xf]
      %v1991 = vld [vmem:[%s1988 + $0x8] sm:$0xf]
      %v1992 = vld [vmem:[%s1988 + $0xc] sm:$0xf]
      %v1993 = vlaneseq
      %v1994 = vshrl.u32 %v1993, 7
      %v1995 = vsub.s32 4, %v1994
      %v1996 = vrot.slane %v443, %v1995
      %v2001 = vunpack.c.l.b16 %v1989
      %v2002 = vunpack.c.l.b16 %v1990
      %v2003 = vunpack.c.l.b16 %v1991
      %v2004 = vunpack.c.l.b16 %v1992
      %v2005 = vpack.c.b16 %v2002, %v2001
      %v2006 = vpack.c.b16 %v2004, %v2003
      %v2010 = vsel %vm447, %v1987, 0
      %2012 = vmatprep.subr.bf16.mxu0 0
      %2013 = vmatpush1.bf16.msra.mxu0 %v2005
      %2014 = vmatprep.subr.bf16.mxu0 0
      %2015 = vmatpush1.bf16.msra.mxu0 %v2006
      %2016 = vmatprep.subr.bf16.mxu0 0
      %2017 = vmatpush1.bf16.msra.mxu0 0
      %2018 = vmatprep.subr.bf16.mxu0 0
      %2019 = vmatpush1.bf16.msra.mxu0 0
      %2020 = vmatprep.subr.bf16.mxu0 0
      %2021 = vmatpush1.bf16.msra.mxu0 0
      %2022 = vmatprep.subr.bf16.mxu0 0
      %2023 = vmatpush1.bf16.msra.mxu0 0
      %2024 = vmatprep.subr.bf16.mxu0 0
      %2025 = vmatpush1.bf16.msra.mxu0 0
      %2026 = vmatprep.subr.bf16.mxu0 0
      %2027 = vmatpush1.bf16.msra.mxu0 0
      %2028 = vmatprep.subr.bf16.mxu0 0
      %2029 = vmatpush1.bf16.msra.mxu0 0
      %2030 = vmatprep.subr.bf16.mxu0 0
      %2031 = vmatpush1.bf16.msra.mxu0 0
      %2032 = vmatprep.subr.bf16.mxu0 0
      %2033 = vmatpush1.bf16.msra.mxu0 0
      %2034 = vmatprep.subr.bf16.mxu0 0
      %2035 = vmatpush1.bf16.msra.mxu0 0
      %2036 = vmatprep.subr.bf16.mxu0 0
      %2037 = vmatpush1.bf16.msra.mxu0 0
      %2038 = vmatprep.subr.bf16.mxu0 0
      %2039 = vmatpush1.bf16.msra.mxu0 0
      %2040 = vmatprep.subr.bf16.mxu0 0
      %2041 = vmatpush1.bf16.msra.mxu0 0
      %2042 = vmatprep.subr.bf16.mxu0 0
      %2043 = vmatpush1.bf16.msra.mxu0 0
      %2044 = vmatprep.mubr.bf16.mxu0 0
      %2045 = vmatmul.mubr.bf16.gmra.mrb[0].mxu0 %v2010
      %v2046 = vpop.f32.mrb[0].mxu0
      %v2047 = vadd.f32 %v1996, %v2046
      %v2048 = vpop.f32.mrb[0].mxu0
      %v2049 = vpop.f32.mrb[0].mxu0
      %v2050 = vadd.f32 %v1996, %v2049
      %v2051 = vpop.f32.mrb[0].mxu0
      %2052 = vdwg.mxu0
      %v2053 = vmul.f32 %v2047, 0.5
      %v2054 = vmul.f32 %v2050, 0.5
      %v2055 = vmul.f32 %v2047, 0.044715
      %v2056 = vmul.f32 %v2050, 0.044715
      %v2057 = vmul.f32 %v2055, %v2047
      %v2058 = vmul.f32 %v2056, %v2050
      %v2059 = vmul.f32 %v2057, %v2047
      %v2060 = vmul.f32 %v2058, %v2050
      %v2061 = vadd.f32 %v2047, %v2059
      %v2062 = vadd.f32 %v2050, %v2060
      %v2063 = vmul.f32 %v2061, 0.7978846
      %v2064 = vmul.f32 %v2062, 0.7978846
      %v2065 = vtanh.pop %v2063
      %v2066 = vtanh.pop %v2064
      %v2067 = vadd.f32 %v2065, 1.0
      %v2068 = vadd.f32 %v2066, 1.0
      %v2069 = vmul.f32 %v2053, %v2067
      %v2070 = vmul.f32 %v2054, %v2068
      %v2071 = vpack.c.bf16 %v2070, %v2069
      %s2072 = scalar_lea.vmem %s426, 32
      %v2073 = vld [vmem:[%s2072] sm:$0xf]
      %v2074 = vld [vmem:[%s2072 + $0x4] sm:$0xf]
      %v2075 = vld [vmem:[%s2072 + $0x8] sm:$0xf]
      %v2076 = vld [vmem:[%s2072 + $0xc] sm:$0xf]
      %v2077 = vld [vmem:[%s2072 + $0x10] sm:$0xf]
      %v2078 = vld [vmem:[%s2072 + $0x14] sm:$0xf]
      %v2079 = vld [vmem:[%s2072 + $0x18] sm:$0xf]
      %v2080 = vld [vmem:[%s2072 + $0x1c] sm:$0xf]
      %v2081 = vlaneseq
      %v2082 = vshrl.u32 %v2081, 7
      %v2083 = vsub.s32 5, %v2082
      %v2084 = vrot.slane %v443, %v2083
      %v2093 = vunpack.c.l.b16 %v2073
      %v2094 = vunpack.c.l.b16 %v2074
      %v2095 = vunpack.c.l.b16 %v2075
      %v2096 = vunpack.c.l.b16 %v2076
      %v2097 = vunpack.c.l.b16 %v2077
      %v2098 = vunpack.c.l.b16 %v2078
      %v2099 = vunpack.c.l.b16 %v2079
      %v2100 = vunpack.c.l.b16 %v2080
      %v2101 = vpack.c.b16 %v2094, %v2093
      %v2102 = vpack.c.b16 %v2096, %v2095
      %v2103 = vpack.c.b16 %v2098, %v2097
      %v2104 = vpack.c.b16 %v2100, %v2099
      %v2110 = vsel %vm1274, %v2071, 0
      %2112 = vmatprep.subr.bf16.mxu0 0
      %2113 = vmatpush1.bf16.msra.mxu0 %v2101
      %2114 = vmatprep.subr.bf16.mxu0 0
      %2115 = vmatpush1.bf16.msra.mxu0 %v2102
      %2116 = vmatprep.subr.bf16.mxu0 0
      %2117 = vmatpush1.bf16.msra.mxu0 %v2103
      %2118 = vmatprep.subr.bf16.mxu0 0
      %2119 = vmatpush1.bf16.msra.mxu0 %v2104
      %2120 = vmatprep.subr.bf16.mxu0 0
      %2121 = vmatpush1.bf16.msra.mxu0 0
      %2122 = vmatprep.subr.bf16.mxu0 0
      %2123 = vmatpush1.bf16.msra.mxu0 0
      %2124 = vmatprep.subr.bf16.mxu0 0
      %2125 = vmatpush1.bf16.msra.mxu0 0
      %2126 = vmatprep.subr.bf16.mxu0 0
      %2127 = vmatpush1.bf16.msra.mxu0 0
      %2128 = vmatprep.subr.bf16.mxu0 0
      %2129 = vmatpush1.bf16.msra.mxu0 0
      %2130 = vmatprep.subr.bf16.mxu0 0
      %2131 = vmatpush1.bf16.msra.mxu0 0
      %2132 = vmatprep.subr.bf16.mxu0 0
      %2133 = vmatpush1.bf16.msra.mxu0 0
      %2134 = vmatprep.subr.bf16.mxu0 0
      %2135 = vmatpush1.bf16.msra.mxu0 0
      %2136 = vmatprep.subr.bf16.mxu0 0
      %2137 = vmatpush1.bf16.msra.mxu0 0
      %2138 = vmatprep.subr.bf16.mxu0 0
      %2139 = vmatpush1.bf16.msra.mxu0 0
      %2140 = vmatprep.subr.bf16.mxu0 0
      %2141 = vmatpush1.bf16.msra.mxu0 0
      %2142 = vmatprep.subr.bf16.mxu0 0
      %2143 = vmatpush1.bf16.msra.mxu0 0
      %2144 = vmatprep.mubr.bf16.mxu0 0
      %2145 = vmatmul.mubr.bf16.gmra.mrb[0].mxu0 %v2110
      %v2146 = vpop.f32.mrb[0].mxu0
      %v2147 = vadd.f32 %v2084, %v2146
      %v2148 = vpop.f32.mrb[0].mxu0
      %v2149 = vpop.f32.mrb[0].mxu0
      %v2150 = vadd.f32 %v2084, %v2149
      %v2151 = vpop.f32.mrb[0].mxu0
      %2152 = vdwg.mxu0
      %v2153 = vadd.f32 %v1985, %v2147
      %v2154 = vadd.f32 %v1986, %v2150
      %v2155 = vsel %vm447, %v2153, 0.0
      %2156 = vadd.xlane.f32.xlu0 %v2155
      %v2157 = vpop.xlane.xlu0 %2156
      %v2158 = vsel %vm447, %v2154, 0.0
      %2159 = vadd.xlane.f32.xlu0 %v2158
      %v2160 = vpop.xlane.xlu0 %2159
      %v2161 = vmul.f32 %v2157, %v454
      %v2162 = vmul.f32 %v2160, %v454
      %v2163 = vsub.f32 %v2153, %v2161
      %v2164 = vsub.f32 %v2154, %v2162
      %v2165 = vmul.f32 %v2163, %v2163
      %v2166 = vmul.f32 %v2164, %v2164
      %v2167 = vsel %vm447, %v2165, 0.0
      %2168 = vadd.xlane.f32.xlu0 %v2167
      %v2169 = vpop.xlane.xlu0 %2168
      %v2170 = vsel %vm447, %v2166, 0.0
      %2171 = vadd.xlane.f32.xlu0 %v2170
      %v2172 = vpop.xlane.xlu0 %2171
      %v2173 = vmul.f32 %v2169, %v454
      %v2174 = vmul.f32 %v2172, %v454
      %v2175 = vadd.f32 %v2173, 1e-12
      %v2176 = vadd.f32 %v2174, 1e-12
      %v2177 = vrsqrt.pop %v2175
      %v2178 = vrsqrt.pop %v2176
      %v2179 = vmul.f32 %v2163, %v2177
      %v2180 = vmul.f32 %v2164, %v2178
      %v2181 = vlaneseq
      %v2182 = vshrl.u32 %v2181, 7
      %v2183 = vsub.s32 6, %v2182
      %v2184 = vrot.slane %v443, %v2183
      %v2185 = vmul.f32 %v2179, %v2184
      %v2186 = vmul.f32 %v2180, %v2184
      %v2187 = vlaneseq
      %v2188 = vshrl.u32 %v2187, 7
      %v2189 = vsub.s32 7, %v2188
      %v2190 = vrot.slane %v443, %v2189
      %v2191 = vadd.f32 %v2185, %v2190
      %v2192 = vadd.f32 %v2186, %v2190
      %v2193 = vsel %vm447, %v2191, 0.0
      %v2194 = vrot.slane %v2193, 4
      %v2195 = vadd.f32 %v2193, %v2194
      %v2196 = vrot.slane %v2195, 2
      %v2197 = vadd.f32 %v2195, %v2196
      %v2198 = vrot.slane %v2197, 1
      %v2199 = vadd.f32 %v2197, %v2198
      %v2200 = vsel %vm447, %v2192, 0.0
      %v2201 = vrot.slane %v2200, 4
      %v2202 = vadd.f32 %v2200, %v2201
      %v2203 = vrot.slane %v2202, 2
      %v2204 = vadd.f32 %v2202, %v2203
      %v2205 = vrot.slane %v2204, 1
      %v2206 = vadd.f32 %v2204, %v2205
      %v2207 = vrcp.pop 8.0
      %v2208 = vmul.f32 %v2199, %v2207
      %v2209 = vmul.f32 %v2206, %v2207
      %v2210 = vpack.c.bf16 %v2208, %v2208
      %v2211 = vpack.c.bf16 %v2209, %v2209
      %v2212 = vld [vmem:[%s431] sm:$0xf]
      %v2213 = vld [vmem:[%s431 + $0x4] sm:$0xf]
      %v2214 = vld [vmem:[%s431 + $0x8] sm:$0xf]
      %v2215 = vld [vmem:[%s431 + $0xc] sm:$0xf]
      %v2216 = vlaneseq
      %v2217 = vshrl.u32 %v2216, 7
      %v2218 = vsub.s32 2, %v2217
      %v2219 = vrot.slane %v444, %v2218
      %v2222 = vunpack.c.l.b16 %v2210
      %v2223 = vunpack.c.l.b16 %v2211
      %vm2224 = vcmask 1041409
      %v2225 = vsel %vm2224, %v2223, %v2222
      %v2226 = vpack.c.b16 %v2225, %v2225
      %v2231 = vunpack.c.l.b16 %v2212
      %v2232 = vunpack.c.l.b16 %v2213
      %v2233 = vunpack.c.l.b16 %v2214
      %v2234 = vunpack.c.l.b16 %v2215
      %v2235 = vpack.c.b16 %v2232, %v2231
      %v2236 = vpack.c.b16 %v2234, %v2233
      %v2240 = vsel %vm447, %v2226, 0
      %2242 = vmatprep.subr.bf16.mxu0 0
      %2243 = vmatpush1.bf16.msra.mxu0 %v2235
      %2244 = vmatprep.subr.bf16.mxu0 0
      %2245 = vmatpush1.bf16.msra.mxu0 %v2236
      %2246 = vmatprep.subr.bf16.mxu0 0
      %2247 = vmatpush1.bf16.msra.mxu0 0
      %2248 = vmatprep.subr.bf16.mxu0 0
      %2249 = vmatpush1.bf16.msra.mxu0 0
      %2250 = vmatprep.subr.bf16.mxu0 0
      %2251 = vmatpush1.bf16.msra.mxu0 0
      %2252 = vmatprep.subr.bf16.mxu0 0
      %2253 = vmatpush1.bf16.msra.mxu0 0
      %2254 = vmatprep.subr.bf16.mxu0 0
      %2255 = vmatpush1.bf16.msra.mxu0 0
      %2256 = vmatprep.subr.bf16.mxu0 0
      %2257 = vmatpush1.bf16.msra.mxu0 0
      %2258 = vmatprep.subr.bf16.mxu0 0
      %2259 = vmatpush1.bf16.msra.mxu0 0
      %2260 = vmatprep.subr.bf16.mxu0 0
      %2261 = vmatpush1.bf16.msra.mxu0 0
      %2262 = vmatprep.subr.bf16.mxu0 0
      %2263 = vmatpush1.bf16.msra.mxu0 0
      %2264 = vmatprep.subr.bf16.mxu0 0
      %2265 = vmatpush1.bf16.msra.mxu0 0
      %2266 = vmatprep.subr.bf16.mxu0 0
      %2267 = vmatpush1.bf16.msra.mxu0 0
      %2268 = vmatprep.subr.bf16.mxu0 0
      %2269 = vmatpush1.bf16.msra.mxu0 0
      %2270 = vmatprep.subr.bf16.mxu0 0
      %2271 = vmatpush1.bf16.msra.mxu0 0
      %2272 = vmatprep.subr.bf16.mxu0 0
      %2273 = vmatpush1.bf16.msra.mxu0 0
      %2274 = vmatprep.mubr.bf16.mxu0 0
      %2275 = vmatmul.mubr.bf16.gmra.mrb[0].mxu0 %v2240
      %v2276 = vpop.f32.mrb[0].mxu0
      %v2277 = vadd.f32 %v2219, %v2276
      %v2278 = vpop.f32.mrb[0].mxu0
      %v2279 = vpop.f32.mrb[0].mxu0
      %v2280 = vpop.f32.mrb[0].mxu0
      %2281 = vdwg.mxu0
      %2282 = vst [vmem:[%s440] sm:$0x3] %v2277
      %p2283 = scmp.lt.s32.totalorder %s19, 1
      %s2284 = scalar_select %p2283, %s19, 1
      %s2285 = smul.addr %s2284, 2
      %s2286 = scalar_lea.vmem %s8, %s2285
      // Predicated region
      $region53: #{bert_regressor_forward.1} parent=51 // pred_check
        %p2287 = pneg %p245
      $region54: #{bert_regressor_forward.1} parent=51 // pred_check_branch
        %2289 = sbr.rel (%p2287) target = $region56
      $region55: #{bert_regressor_forward.1} parent=51 // pred_region
        _
      $region56: #{bert_regressor_forward.1} parent=51 // pred_fallthru
        _
    $region52: #{bert_regressor_forward.1} parent=5 // pred_fallthru
      _
    %p2290 = scmp.le.s32.totalorder 2, %s14
    // Predicated region
    $region57: #{bert_regressor_forward.1} parent=5 // pred_check
      %p2291 = pneg %p2290
    $region58: #{bert_regressor_forward.1} parent=5 // pred_check_branch
      %2293 = sbr.rel (%p2291) target = $region60
    $region59: #{bert_regressor_forward.1} parent=5 // pred_region
      %s2294 = ssub.s32 %s14, 2
      // Predicated region
      $region61: #{bert_regressor_forward.1} parent=59 // pred_check
        %p2295 = pneg %p251
      $region62: #{bert_regressor_forward.1} parent=59 // pred_check_branch
        %2297 = sbr.rel (%p2295) target = $region64
      $region63: #{bert_regressor_forward.1} parent=59 // pred_region
        %p2298 = scmp.lt.s32.totalorder %s20, 1
        %s2299 = scalar_select %p2298, %s20, 1
        %s2300 = smul.addr %s2299, 2
        %s2301 = scalar_lea.vmem %s8, %s2300
      $region64: #{bert_regressor_forward.1} parent=59 // pred_fallthru
        _
    $region60: #{bert_regressor_forward.1} parent=5 // pred_fallthru
      _
  $region6: #{bert_regressor_forward.1} parent=0 // loop_footer
    %s18 = sadd.s32 1, %s14
  $region7: #{bert_regressor_forward.1} parent=0 // loop_footer_branch
    %13 = sbr.rel target = $region3
  $region8: #{bert_regressor_forward.1} parent=0 // loop_exit
    _

</llo_original>
